<compile_context>
chip_gen: v7x
topology: tpu7x:2x2x1
jax: 0.10.0
libtpu: 0.0.40
codegen_flags: <defaults>
</compile_context>

<pallas_src>
import functools
import math

import jax
import jax.numpy as jnp
from jax.experimental import pallas as pl
from jax.experimental.pallas import tpu as pltpu


def double_conv_kernel(x_ref, m_ref, w1_ref, b1_ref, w2_ref, b2_ref, o_ref, *,
                       W, fold1, fold2):
    """One batch block.

    x_ref : (Bt, Cin, HW)            input images, channel-major, flat spatial on lanes
    m_ref : (9, 1, HW)  f32          per-tap 0/1 halo masks (tap = (dy+1)*3 + (dx+1))
    w1_ref: (Cmid, 9*Cin)   if fold1 else (9, Cmid, Cin)
    b1_ref: (Cmid, 1)
    w2_ref: (Cout, 9*Cmid)  if fold2 else (9, Cout, Cmid)
    b2_ref: (Cout, 1)
    o_ref : (Bt, Cout, HW)           lane-dense output
    """
    Bt = x_ref.shape[0]
    HW = x_ref.shape[2]

    # Flat-index offset of each tap (dy, dx); tap order matches the weight packing.
    offs = [dy * W + dx for dy in (-1, 0, 1) for dx in (-1, 0, 1)]

    def shifted_pieces(y):
        # y: (C, HW) f32 -> 9 masked, lane-rolled copies (one per tap).
        # roll(y, -off)[p] == y[p + off]; the mask zeroes positions whose
        # (row+dy, col+dx) falls outside the image, which also kills any
        # cyclic wrap / cross-row contamination.
        out = []
        for t, off in enumerate(offs):
            s = pltpu.roll(y, shift=(-off) % HW, axis=1) if off else y
            out.append(s * m_ref[t])          # (1, HW) mask broadcasts over sublanes
        return out

    def conv_relu(y, w_ref, b_ref, folded):
        pieces = shifted_pieces(y)
        if folded:
            # Single MXU matmul: (Co, 9*C) @ (9*C, HW) -> (Co, HW).
            patch = jnp.concatenate(pieces, axis=0)
            acc = jnp.dot(w_ref[...].astype(jnp.float32), patch,
                          preferred_element_type=jnp.float32)
        else:
            # Channel count not sublane-aligned: 9 small accumulating matmuls.
            acc = jnp.zeros((w_ref.shape[1], HW), jnp.float32)
            for t in range(9):
                acc = acc + jnp.dot(w_ref[t].astype(jnp.float32), pieces[t],
                                    preferred_element_type=jnp.float32)
        return jnp.maximum(acc + b_ref[...].astype(jnp.float32), 0.0)

    for b in range(Bt):                                   # static unroll over the block
        y1 = conv_relu(x_ref[b].astype(jnp.float32), w1_ref, b1_ref, fold1)
        y2 = conv_relu(y1, w2_ref, b2_ref, fold2)
        o_ref[b] = y2.astype(o_ref.dtype)


def _pack_weight(w):
    """PyTorch (Co, Ci, 3, 3) -> (Co, 9*Ci) if Ci is sublane-aligned, else (9, Co, Ci)."""
    co, ci = w.shape[0], w.shape[1]
    wt = jnp.transpose(w, (2, 3, 0, 1)).reshape(9, co, ci)      # tap-major: t = ky*3+kx
    if ci % 8 == 0:
        return jnp.transpose(wt, (1, 0, 2)).reshape(co, 9 * ci), True
    return wt, False


def _halo_masks(h, w):
    """(9, 1, H*W) float32 0/1 masks, tap order t = (dy+1)*3 + (dx+1)."""
    ys, xs = jnp.meshgrid(jnp.arange(h), jnp.arange(w), indexing="ij")
    masks = []
    for dy in (-1, 0, 1):
        for dx in (-1, 0, 1):
            ok = ((ys + dy >= 0) & (ys + dy < h) & (xs + dx >= 0) & (xs + dx < w))
            masks.append(ok.reshape(1, h * w))
    return jnp.stack(masks, axis=0).astype(jnp.float32)


def double_conv(x_nchw, params):
    """x_nchw: (B, Cin, H, W) -> (B, Cout, H, W). Matches PyTorch DoubleConv.forward."""
    b, cin, h, w = x_nchw.shape
    cmid = params["w1"].shape[0]
    cout = params["w2"].shape[0]
    hw = h * w

    # Batch block: largest divisor of B up to 8 (amortizes per-grid-step overhead).
    bt = max(d for d in range(1, min(b, 8) + 1) if b % d == 0)

    # Free reshape of NCHW: channel-major already matches the (C, HW) kernel layout.
    x = x_nchw.reshape(b, cin, hw)

    w1p, fold1 = _pack_weight(params["w1"])
    w2p, fold2 = _pack_weight(params["w2"])
    b1 = params["b1"].reshape(cmid, 1)
    b2 = params["b2"].reshape(cout, 1)
    masks = _halo_masks(h, w)

    out = pl.pallas_call(
        functools.partial(double_conv_kernel, W=w, fold1=fold1, fold2=fold2),
        out_shape=jax.ShapeDtypeStruct((b, cout, hw), x_nchw.dtype),
        grid=(b // bt,),
        in_specs=[
            pl.BlockSpec((bt, cin, hw), lambda i: (i, 0, 0)),          # x block
            pl.BlockSpec((9, 1, hw), lambda i: (0, 0, 0)),             # halo masks
            pl.BlockSpec(w1p.shape, lambda i, n=w1p.ndim: (0,) * n),   # conv1 weights
            pl.BlockSpec((cmid, 1), lambda i: (0, 0)),                 # conv1 bias
            pl.BlockSpec(w2p.shape, lambda i, n=w2p.ndim: (0,) * n),   # conv2 weights
            pl.BlockSpec((cout, 1), lambda i: (0, 0)),                 # conv2 bias
        ],
        out_specs=pl.BlockSpec((bt, cout, hw), lambda i: (i, 0, 0)),
        compiler_params=pltpu.CompilerParams(dimension_semantics=("parallel",)),
    )(x, masks, w1p, b1, w2p, b2)

    # (B, Cout, H*W) -> (B, Cout, H, W): free reshape, no transpose.
    return out.reshape(b, cout, h, w)


def reference_forward(x, params):
    """Plain-JAX/XLA reference replicating the PyTorch forward (eval mode)."""
    def conv_relu(z, wgt, bias):
        y = jax.lax.conv_general_dilated(
            z, wgt, window_strides=(1, 1), padding="SAME",
            dimension_numbers=("NCHW", "OIHW", "NCHW"))
        return jnp.maximum(y + bias[None, :, None, None], 0.0)

    return conv_relu(conv_relu(x, params["w1"], params["b1"]),
                     params["w2"], params["b2"])


if __name__ == "__main__":
    B, CIN, COUT, H, W = 2, 4, 8, 16, 16

    key = jax.random.PRNGKey(0)
    k1, k2, k3, k4, kx = jax.random.split(key, 5)
    params = {
        "w1": jax.random.normal(k1, (COUT, CIN, 3, 3), jnp.float32)
              * (1.0 / math.sqrt(CIN * 9)),
        "b1": jax.random.normal(k2, (COUT,), jnp.float32) * 0.1,
        "w2": jax.random.normal(k3, (COUT, COUT, 3, 3), jnp.float32)
              * (1.0 / math.sqrt(COUT * 9)),
        "b2": jax.random.normal(k4, (COUT,), jnp.float32) * 0.1,
    }
    x = jax.random.normal(kx, (B, CIN, H, W), jnp.float32)

    out = double_conv(x, params)
    out = jax.block_until_ready(out)

    ref = reference_forward(x, params)
    assert out.shape == (B, COUT, H, W)
    max_err = float(jnp.max(jnp.abs(out - ref)))
    assert jnp.allclose(out, ref, atol=1e-4, rtol=1e-4), f"mismatch vs reference: {max_err}"

    print("KERNEL_OK")
</pallas_src>

<mosaic_0001>
module attributes {stable_mosaic.version = 11 : i64} {
  func.func @double_conv_kernel(%arg0: i32, %arg1: memref<2x4x256xf32, #tpu.memory_space<vmem>>, %arg2: memref<9x1x256xf32, #tpu.memory_space<vmem>>, %arg3: memref<9x8x4xf32, #tpu.memory_space<vmem>>, %arg4: memref<8x1xf32, #tpu.memory_space<vmem>>, %arg5: memref<8x72xf32, #tpu.memory_space<vmem>>, %arg6: memref<8x1xf32, #tpu.memory_space<vmem>>, %arg7: memref<2x8x256xf32, #tpu.memory_space<vmem>>) attributes {dimension_semantics = [#tpu.dimension_semantics<parallel>], iteration_bounds = array<i64: 1>, scalar_prefetch = 0 : i64, scratch_operands = 0 : i64, tpu.core_type = #tpu.core_type<tc>, window_params = [{transform_indices = @transform_0, window_bounds = array<i64: 2, 4, 256>}, {pipeline_mode = #tpu.pipeline_mode<synchronous>, transform_indices = @transform_1, window_bounds = array<i64: 9, 1, 256>}, {pipeline_mode = #tpu.pipeline_mode<synchronous>, transform_indices = @transform_2, window_bounds = array<i64: 9, 8, 4>}, {pipeline_mode = #tpu.pipeline_mode<synchronous>, transform_indices = @transform_3, window_bounds = array<i64: 8, 1>}, {pipeline_mode = #tpu.pipeline_mode<synchronous>, transform_indices = @transform_4, window_bounds = array<i64: 8, 72>}, {pipeline_mode = #tpu.pipeline_mode<synchronous>, transform_indices = @transform_5, window_bounds = array<i64: 8, 1>}, {transform_indices = @transform_6, window_bounds = array<i64: 2, 8, 256>}]} {
    %c0 = arith.constant 0 : index
    %c0_0 = arith.constant 0 : index
    %c0_1 = arith.constant 0 : index
    %0 = vector.load %arg1[%c0, %c0_0, %c0_1] : memref<2x4x256xf32, #tpu.memory_space<vmem>>, vector<1x4x256xf32>
    %1 = vector.shape_cast %0 : vector<1x4x256xf32> to vector<4x256xf32>
    %c17_i32 = arith.constant 17 : i32
    %2 = tpu.dynamic_rotate %1 by %c17_i32 dim 1 : vector<4x256xf32>, i32 -> vector<4x256xf32>
    %c0_2 = arith.constant 0 : index
    %c0_3 = arith.constant 0 : index
    %c0_4 = arith.constant 0 : index
    %3 = vector.load %arg2[%c0_2, %c0_3, %c0_4] : memref<9x1x256xf32, #tpu.memory_space<vmem>>, vector<1x1x256xf32>
    %4 = vector.shape_cast %3 : vector<1x1x256xf32> to vector<1x256xf32>
    %5 = vector.broadcast %4 : vector<1x256xf32> to vector<4x256xf32>
    %6 = arith.mulf %2, %5 : vector<4x256xf32>
    %c16_i32 = arith.constant 16 : i32
    %7 = tpu.dynamic_rotate %1 by %c16_i32 dim 1 : vector<4x256xf32>, i32 -> vector<4x256xf32>
    %c1 = arith.constant 1 : index
    %c0_5 = arith.constant 0 : index
    %c0_6 = arith.constant 0 : index
    %8 = vector.load %arg2[%c1, %c0_5, %c0_6] : memref<9x1x256xf32, #tpu.memory_space<vmem>>, vector<1x1x256xf32>
    %9 = vector.shape_cast %8 : vector<1x1x256xf32> to vector<1x256xf32>
    %10 = vector.broadcast %9 : vector<1x256xf32> to vector<4x256xf32>
    %11 = arith.mulf %7, %10 : vector<4x256xf32>
    %c15_i32 = arith.constant 15 : i32
    %12 = tpu.dynamic_rotate %1 by %c15_i32 dim 1 : vector<4x256xf32>, i32 -> vector<4x256xf32>
    %c2 = arith.constant 2 : index
    %c0_7 = arith.constant 0 : index
    %c0_8 = arith.constant 0 : index
    %13 = vector.load %arg2[%c2, %c0_7, %c0_8] : memref<9x1x256xf32, #tpu.memory_space<vmem>>, vector<1x1x256xf32>
    %14 = vector.shape_cast %13 : vector<1x1x256xf32> to vector<1x256xf32>
    %15 = vector.broadcast %14 : vector<1x256xf32> to vector<4x256xf32>
    %16 = arith.mulf %12, %15 : vector<4x256xf32>
    %c1_i32 = arith.constant 1 : i32
    %17 = tpu.dynamic_rotate %1 by %c1_i32 dim 1 : vector<4x256xf32>, i32 -> vector<4x256xf32>
    %c3 = arith.constant 3 : index
    %c0_9 = arith.constant 0 : index
    %c0_10 = arith.constant 0 : index
    %18 = vector.load %arg2[%c3, %c0_9, %c0_10] : memref<9x1x256xf32, #tpu.memory_space<vmem>>, vector<1x1x256xf32>
    %19 = vector.shape_cast %18 : vector<1x1x256xf32> to vector<1x256xf32>
    %20 = vector.broadcast %19 : vector<1x256xf32> to vector<4x256xf32>
    %21 = arith.mulf %17, %20 : vector<4x256xf32>
    %c4 = arith.constant 4 : index
    %c0_11 = arith.constant 0 : index
    %c0_12 = arith.constant 0 : index
    %22 = vector.load %arg2[%c4, %c0_11, %c0_12] : memref<9x1x256xf32, #tpu.memory_space<vmem>>, vector<1x1x256xf32>
    %23 = vector.shape_cast %22 : vector<1x1x256xf32> to vector<1x256xf32>
    %24 = vector.broadcast %23 : vector<1x256xf32> to vector<4x256xf32>
    %25 = arith.mulf %1, %24 : vector<4x256xf32>
    %c255_i32 = arith.constant 255 : i32
    %26 = tpu.dynamic_rotate %1 by %c255_i32 dim 1 : vector<4x256xf32>, i32 -> vector<4x256xf32>
    %c5 = arith.constant 5 : index
    %c0_13 = arith.constant 0 : index
    %c0_14 = arith.constant 0 : index
    %27 = vector.load %arg2[%c5, %c0_13, %c0_14] : memref<9x1x256xf32, #tpu.memory_space<vmem>>, vector<1x1x256xf32>
    %28 = vector.shape_cast %27 : vector<1x1x256xf32> to vector<1x256xf32>
    %29 = vector.broadcast %28 : vector<1x256xf32> to vector<4x256xf32>
    %30 = arith.mulf %26, %29 : vector<4x256xf32>
    %c241_i32 = arith.constant 241 : i32
    %31 = tpu.dynamic_rotate %1 by %c241_i32 dim 1 : vector<4x256xf32>, i32 -> vector<4x256xf32>
    %c6 = arith.constant 6 : index
    %c0_15 = arith.constant 0 : index
    %c0_16 = arith.constant 0 : index
    %32 = vector.load %arg2[%c6, %c0_15, %c0_16] : memref<9x1x256xf32, #tpu.memory_space<vmem>>, vector<1x1x256xf32>
    %33 = vector.shape_cast %32 : vector<1x1x256xf32> to vector<1x256xf32>
    %34 = vector.broadcast %33 : vector<1x256xf32> to vector<4x256xf32>
    %35 = arith.mulf %31, %34 : vector<4x256xf32>
    %c240_i32 = arith.constant 240 : i32
    %36 = tpu.dynamic_rotate %1 by %c240_i32 dim 1 : vector<4x256xf32>, i32 -> vector<4x256xf32>
    %c7 = arith.constant 7 : index
    %c0_17 = arith.constant 0 : index
    %c0_18 = arith.constant 0 : index
    %37 = vector.load %arg2[%c7, %c0_17, %c0_18] : memref<9x1x256xf32, #tpu.memory_space<vmem>>, vector<1x1x256xf32>
    %38 = vector.shape_cast %37 : vector<1x1x256xf32> to vector<1x256xf32>
    %39 = vector.broadcast %38 : vector<1x256xf32> to vector<4x256xf32>
    %40 = arith.mulf %36, %39 : vector<4x256xf32>
    %c239_i32 = arith.constant 239 : i32
    %41 = tpu.dynamic_rotate %1 by %c239_i32 dim 1 : vector<4x256xf32>, i32 -> vector<4x256xf32>
    %c8 = arith.constant 8 : index
    %c0_19 = arith.constant 0 : index
    %c0_20 = arith.constant 0 : index
    %42 = vector.load %arg2[%c8, %c0_19, %c0_20] : memref<9x1x256xf32, #tpu.memory_space<vmem>>, vector<1x1x256xf32>
    %43 = vector.shape_cast %42 : vector<1x1x256xf32> to vector<1x256xf32>
    %44 = vector.broadcast %43 : vector<1x256xf32> to vector<4x256xf32>
    %45 = arith.mulf %41, %44 : vector<4x256xf32>
    %cst = arith.constant 0.000000e+00 : f32
    %46 = vector.broadcast %cst : f32 to vector<8x256xf32>
    %c0_21 = arith.constant 0 : index
    %c0_22 = arith.constant 0 : index
    %c0_23 = arith.constant 0 : index
    %47 = vector.load %arg3[%c0_21, %c0_22, %c0_23] : memref<9x8x4xf32, #tpu.memory_space<vmem>>, vector<1x8x4xf32>
    %48 = vector.shape_cast %47 : vector<1x8x4xf32> to vector<8x4xf32>
    %cst_24 = arith.constant dense<0.000000e+00> : vector<8x256xf32>
    %49 = tpu.matmul %48, %6, %cst_24 {dimension_numbers = #tpu.dot_dimension_numbers<[1], [0], [0], [1], [0, 0, 1, 1], [], []>} : vector<8x4xf32>, vector<4x256xf32>, vector<8x256xf32> -> vector<8x256xf32>
    %50 = arith.addf %46, %49 : vector<8x256xf32>
    %c1_25 = arith.constant 1 : index
    %c0_26 = arith.constant 0 : index
    %c0_27 = arith.constant 0 : index
    %51 = vector.load %arg3[%c1_25, %c0_26, %c0_27] : memref<9x8x4xf32, #tpu.memory_space<vmem>>, vector<1x8x4xf32>
    %52 = vector.shape_cast %51 : vector<1x8x4xf32> to vector<8x4xf32>
    %cst_28 = arith.constant dense<0.000000e+00> : vector<8x256xf32>
    %53 = tpu.matmul %52, %11, %cst_28 {dimension_numbers = #tpu.dot_dimension_numbers<[1], [0], [0], [1], [0, 0, 1, 1], [], []>} : vector<8x4xf32>, vector<4x256xf32>, vector<8x256xf32> -> vector<8x256xf32>
    %54 = arith.addf %50, %53 : vector<8x256xf32>
    %c2_29 = arith.constant 2 : index
    %c0_30 = arith.constant 0 : index
    %c0_31 = arith.constant 0 : index
    %55 = vector.load %arg3[%c2_29, %c0_30, %c0_31] : memref<9x8x4xf32, #tpu.memory_space<vmem>>, vector<1x8x4xf32>
    %56 = vector.shape_cast %55 : vector<1x8x4xf32> to vector<8x4xf32>
    %cst_32 = arith.constant dense<0.000000e+00> : vector<8x256xf32>
    %57 = tpu.matmul %56, %16, %cst_32 {dimension_numbers = #tpu.dot_dimension_numbers<[1], [0], [0], [1], [0, 0, 1, 1], [], []>} : vector<8x4xf32>, vector<4x256xf32>, vector<8x256xf32> -> vector<8x256xf32>
    %58 = arith.addf %54, %57 : vector<8x256xf32>
    %c3_33 = arith.constant 3 : index
    %c0_34 = arith.constant 0 : index
    %c0_35 = arith.constant 0 : index
    %59 = vector.load %arg3[%c3_33, %c0_34, %c0_35] : memref<9x8x4xf32, #tpu.memory_space<vmem>>, vector<1x8x4xf32>
    %60 = vector.shape_cast %59 : vector<1x8x4xf32> to vector<8x4xf32>
    %cst_36 = arith.constant dense<0.000000e+00> : vector<8x256xf32>
    %61 = tpu.matmul %60, %21, %cst_36 {dimension_numbers = #tpu.dot_dimension_numbers<[1], [0], [0], [1], [0, 0, 1, 1], [], []>} : vector<8x4xf32>, vector<4x256xf32>, vector<8x256xf32> -> vector<8x256xf32>
    %62 = arith.addf %58, %61 : vector<8x256xf32>
    %c4_37 = arith.constant 4 : index
    %c0_38 = arith.constant 0 : index
    %c0_39 = arith.constant 0 : index
    %63 = vector.load %arg3[%c4_37, %c0_38, %c0_39] : memref<9x8x4xf32, #tpu.memory_space<vmem>>, vector<1x8x4xf32>
    %64 = vector.shape_cast %63 : vector<1x8x4xf32> to vector<8x4xf32>
    %cst_40 = arith.constant dense<0.000000e+00> : vector<8x256xf32>
    %65 = tpu.matmul %64, %25, %cst_40 {dimension_numbers = #tpu.dot_dimension_numbers<[1], [0], [0], [1], [0, 0, 1, 1], [], []>} : vector<8x4xf32>, vector<4x256xf32>, vector<8x256xf32> -> vector<8x256xf32>
    %66 = arith.addf %62, %65 : vector<8x256xf32>
    %c5_41 = arith.constant 5 : index
    %c0_42 = arith.constant 0 : index
    %c0_43 = arith.constant 0 : index
    %67 = vector.load %arg3[%c5_41, %c0_42, %c0_43] : memref<9x8x4xf32, #tpu.memory_space<vmem>>, vector<1x8x4xf32>
    %68 = vector.shape_cast %67 : vector<1x8x4xf32> to vector<8x4xf32>
    %cst_44 = arith.constant dense<0.000000e+00> : vector<8x256xf32>
    %69 = tpu.matmul %68, %30, %cst_44 {dimension_numbers = #tpu.dot_dimension_numbers<[1], [0], [0], [1], [0, 0, 1, 1], [], []>} : vector<8x4xf32>, vector<4x256xf32>, vector<8x256xf32> -> vector<8x256xf32>
    %70 = arith.addf %66, %69 : vector<8x256xf32>
    %c6_45 = arith.constant 6 : index
    %c0_46 = arith.constant 0 : index
    %c0_47 = arith.constant 0 : index
    %71 = vector.load %arg3[%c6_45, %c0_46, %c0_47] : memref<9x8x4xf32, #tpu.memory_space<vmem>>, vector<1x8x4xf32>
    %72 = vector.shape_cast %71 : vector<1x8x4xf32> to vector<8x4xf32>
    %cst_48 = arith.constant dense<0.000000e+00> : vector<8x256xf32>
    %73 = tpu.matmul %72, %35, %cst_48 {dimension_numbers = #tpu.dot_dimension_numbers<[1], [0], [0], [1], [0, 0, 1, 1], [], []>} : vector<8x4xf32>, vector<4x256xf32>, vector<8x256xf32> -> vector<8x256xf32>
    %74 = arith.addf %70, %73 : vector<8x256xf32>
    %c7_49 = arith.constant 7 : index
    %c0_50 = arith.constant 0 : index
    %c0_51 = arith.constant 0 : index
    %75 = vector.load %arg3[%c7_49, %c0_50, %c0_51] : memref<9x8x4xf32, #tpu.memory_space<vmem>>, vector<1x8x4xf32>
    %76 = vector.shape_cast %75 : vector<1x8x4xf32> to vector<8x4xf32>
    %cst_52 = arith.constant dense<0.000000e+00> : vector<8x256xf32>
    %77 = tpu.matmul %76, %40, %cst_52 {dimension_numbers = #tpu.dot_dimension_numbers<[1], [0], [0], [1], [0, 0, 1, 1], [], []>} : vector<8x4xf32>, vector<4x256xf32>, vector<8x256xf32> -> vector<8x256xf32>
    %78 = arith.addf %74, %77 : vector<8x256xf32>
    %c8_53 = arith.constant 8 : index
    %c0_54 = arith.constant 0 : index
    %c0_55 = arith.constant 0 : index
    %79 = vector.load %arg3[%c8_53, %c0_54, %c0_55] : memref<9x8x4xf32, #tpu.memory_space<vmem>>, vector<1x8x4xf32>
    %80 = vector.shape_cast %79 : vector<1x8x4xf32> to vector<8x4xf32>
    %cst_56 = arith.constant dense<0.000000e+00> : vector<8x256xf32>
    %81 = tpu.matmul %80, %45, %cst_56 {dimension_numbers = #tpu.dot_dimension_numbers<[1], [0], [0], [1], [0, 0, 1, 1], [], []>} : vector<8x4xf32>, vector<4x256xf32>, vector<8x256xf32> -> vector<8x256xf32>
    %82 = arith.addf %78, %81 : vector<8x256xf32>
    %c0_57 = arith.constant 0 : index
    %c0_58 = arith.constant 0 : index
    %83 = vector.load %arg4[%c0_57, %c0_58] : memref<8x1xf32, #tpu.memory_space<vmem>>, vector<8x1xf32>
    %84 = vector.broadcast %83 : vector<8x1xf32> to vector<8x256xf32>
    %85 = arith.addf %82, %84 : vector<8x256xf32>
    %cst_59 = arith.constant 0.000000e+00 : f32
    %86 = vector.broadcast %cst_59 : f32 to vector<8x256xf32>
    %87 = arith.maximumf %85, %86 : vector<8x256xf32>
    %c17_i32_60 = arith.constant 17 : i32
    %88 = tpu.dynamic_rotate %87 by %c17_i32_60 dim 1 : vector<8x256xf32>, i32 -> vector<8x256xf32>
    %c0_61 = arith.constant 0 : index
    %c0_62 = arith.constant 0 : index
    %c0_63 = arith.constant 0 : index
    %89 = vector.load %arg2[%c0_61, %c0_62, %c0_63] : memref<9x1x256xf32, #tpu.memory_space<vmem>>, vector<1x1x256xf32>
    %90 = vector.shape_cast %89 : vector<1x1x256xf32> to vector<1x256xf32>
    %91 = vector.broadcast %90 : vector<1x256xf32> to vector<8x256xf32>
    %92 = arith.mulf %88, %91 : vector<8x256xf32>
    %c16_i32_64 = arith.constant 16 : i32
    %93 = tpu.dynamic_rotate %87 by %c16_i32_64 dim 1 : vector<8x256xf32>, i32 -> vector<8x256xf32>
    %c1_65 = arith.constant 1 : index
    %c0_66 = arith.constant 0 : index
    %c0_67 = arith.constant 0 : index
    %94 = vector.load %arg2[%c1_65, %c0_66, %c0_67] : memref<9x1x256xf32, #tpu.memory_space<vmem>>, vector<1x1x256xf32>
    %95 = vector.shape_cast %94 : vector<1x1x256xf32> to vector<1x256xf32>
    %96 = vector.broadcast %95 : vector<1x256xf32> to vector<8x256xf32>
    %97 = arith.mulf %93, %96 : vector<8x256xf32>
    %c15_i32_68 = arith.constant 15 : i32
    %98 = tpu.dynamic_rotate %87 by %c15_i32_68 dim 1 : vector<8x256xf32>, i32 -> vector<8x256xf32>
    %c2_69 = arith.constant 2 : index
    %c0_70 = arith.constant 0 : index
    %c0_71 = arith.constant 0 : index
    %99 = vector.load %arg2[%c2_69, %c0_70, %c0_71] : memref<9x1x256xf32, #tpu.memory_space<vmem>>, vector<1x1x256xf32>
    %100 = vector.shape_cast %99 : vector<1x1x256xf32> to vector<1x256xf32>
    %101 = vector.broadcast %100 : vector<1x256xf32> to vector<8x256xf32>
    %102 = arith.mulf %98, %101 : vector<8x256xf32>
    %c1_i32_72 = arith.constant 1 : i32
    %103 = tpu.dynamic_rotate %87 by %c1_i32_72 dim 1 : vector<8x256xf32>, i32 -> vector<8x256xf32>
    %c3_73 = arith.constant 3 : index
    %c0_74 = arith.constant 0 : index
    %c0_75 = arith.constant 0 : index
    %104 = vector.load %arg2[%c3_73, %c0_74, %c0_75] : memref<9x1x256xf32, #tpu.memory_space<vmem>>, vector<1x1x256xf32>
    %105 = vector.shape_cast %104 : vector<1x1x256xf32> to vector<1x256xf32>
    %106 = vector.broadcast %105 : vector<1x256xf32> to vector<8x256xf32>
    %107 = arith.mulf %103, %106 : vector<8x256xf32>
    %c4_76 = arith.constant 4 : index
    %c0_77 = arith.constant 0 : index
    %c0_78 = arith.constant 0 : index
    %108 = vector.load %arg2[%c4_76, %c0_77, %c0_78] : memref<9x1x256xf32, #tpu.memory_space<vmem>>, vector<1x1x256xf32>
    %109 = vector.shape_cast %108 : vector<1x1x256xf32> to vector<1x256xf32>
    %110 = vector.broadcast %109 : vector<1x256xf32> to vector<8x256xf32>
    %111 = arith.mulf %87, %110 : vector<8x256xf32>
    %c255_i32_79 = arith.constant 255 : i32
    %112 = tpu.dynamic_rotate %87 by %c255_i32_79 dim 1 : vector<8x256xf32>, i32 -> vector<8x256xf32>
    %c5_80 = arith.constant 5 : index
    %c0_81 = arith.constant 0 : index
    %c0_82 = arith.constant 0 : index
    %113 = vector.load %arg2[%c5_80, %c0_81, %c0_82] : memref<9x1x256xf32, #tpu.memory_space<vmem>>, vector<1x1x256xf32>
    %114 = vector.shape_cast %113 : vector<1x1x256xf32> to vector<1x256xf32>
    %115 = vector.broadcast %114 : vector<1x256xf32> to vector<8x256xf32>
    %116 = arith.mulf %112, %115 : vector<8x256xf32>
    %c241_i32_83 = arith.constant 241 : i32
    %117 = tpu.dynamic_rotate %87 by %c241_i32_83 dim 1 : vector<8x256xf32>, i32 -> vector<8x256xf32>
    %c6_84 = arith.constant 6 : index
    %c0_85 = arith.constant 0 : index
    %c0_86 = arith.constant 0 : index
    %118 = vector.load %arg2[%c6_84, %c0_85, %c0_86] : memref<9x1x256xf32, #tpu.memory_space<vmem>>, vector<1x1x256xf32>
    %119 = vector.shape_cast %118 : vector<1x1x256xf32> to vector<1x256xf32>
    %120 = vector.broadcast %119 : vector<1x256xf32> to vector<8x256xf32>
    %121 = arith.mulf %117, %120 : vector<8x256xf32>
    %c240_i32_87 = arith.constant 240 : i32
    %122 = tpu.dynamic_rotate %87 by %c240_i32_87 dim 1 : vector<8x256xf32>, i32 -> vector<8x256xf32>
    %c7_88 = arith.constant 7 : index
    %c0_89 = arith.constant 0 : index
    %c0_90 = arith.constant 0 : index
    %123 = vector.load %arg2[%c7_88, %c0_89, %c0_90] : memref<9x1x256xf32, #tpu.memory_space<vmem>>, vector<1x1x256xf32>
    %124 = vector.shape_cast %123 : vector<1x1x256xf32> to vector<1x256xf32>
    %125 = vector.broadcast %124 : vector<1x256xf32> to vector<8x256xf32>
    %126 = arith.mulf %122, %125 : vector<8x256xf32>
    %c239_i32_91 = arith.constant 239 : i32
    %127 = tpu.dynamic_rotate %87 by %c239_i32_91 dim 1 : vector<8x256xf32>, i32 -> vector<8x256xf32>
    %c8_92 = arith.constant 8 : index
    %c0_93 = arith.constant 0 : index
    %c0_94 = arith.constant 0 : index
    %128 = vector.load %arg2[%c8_92, %c0_93, %c0_94] : memref<9x1x256xf32, #tpu.memory_space<vmem>>, vector<1x1x256xf32>
    %129 = vector.shape_cast %128 : vector<1x1x256xf32> to vector<1x256xf32>
    %130 = vector.broadcast %129 : vector<1x256xf32> to vector<8x256xf32>
    %131 = arith.mulf %127, %130 : vector<8x256xf32>
    %132 = tpu.concatenate %92, %97, %102, %107, %111, %116, %121, %126, %131 in 0 : vector<8x256xf32>, vector<8x256xf32>, vector<8x256xf32>, vector<8x256xf32>, vector<8x256xf32>, vector<8x256xf32>, vector<8x256xf32>, vector<8x256xf32>, vector<8x256xf32> -> vector<72x256xf32>
    %c0_95 = arith.constant 0 : index
    %c0_96 = arith.constant 0 : index
    %133 = vector.load %arg5[%c0_95, %c0_96] : memref<8x72xf32, #tpu.memory_space<vmem>>, vector<8x72xf32>
    %cst_97 = arith.constant dense<0.000000e+00> : vector<8x256xf32>
    %134 = tpu.matmul %133, %132, %cst_97 {dimension_numbers = #tpu.dot_dimension_numbers<[1], [0], [0], [1], [0, 0, 1, 1], [], []>} : vector<8x72xf32>, vector<72x256xf32>, vector<8x256xf32> -> vector<8x256xf32>
    %c0_98 = arith.constant 0 : index
    %c0_99 = arith.constant 0 : index
    %135 = vector.load %arg6[%c0_98, %c0_99] : memref<8x1xf32, #tpu.memory_space<vmem>>, vector<8x1xf32>
    %136 = vector.broadcast %135 : vector<8x1xf32> to vector<8x256xf32>
    %137 = arith.addf %134, %136 : vector<8x256xf32>
    %cst_100 = arith.constant 0.000000e+00 : f32
    %138 = vector.broadcast %cst_100 : f32 to vector<8x256xf32>
    %139 = arith.maximumf %137, %138 : vector<8x256xf32>
    %c0_101 = arith.constant 0 : index
    %c0_102 = arith.constant 0 : index
    %c0_103 = arith.constant 0 : index
    %140 = vector.load %arg7[%c0_101, %c0_102, %c0_103] : memref<2x8x256xf32, #tpu.memory_space<vmem>>, vector<1x8x256xf32>
    %141 = vector.shape_cast %140 : vector<1x8x256xf32> to vector<8x256xf32>
    %142 = vector.shape_cast %139 : vector<8x256xf32> to vector<1x8x256xf32>
    tpu.vector_store %arg7[%c0_101, %c0_102, %c0_103], %142 {strides = array<i32>} : memref<2x8x256xf32, #tpu.memory_space<vmem>>, vector<1x8x256xf32>,
    %c1_104 = arith.constant 1 : index
    %c0_105 = arith.constant 0 : index
    %c0_106 = arith.constant 0 : index
    %143 = vector.load %arg1[%c1_104, %c0_105, %c0_106] : memref<2x4x256xf32, #tpu.memory_space<vmem>>, vector<1x4x256xf32>
    %144 = vector.shape_cast %143 : vector<1x4x256xf32> to vector<4x256xf32>
    %c17_i32_107 = arith.constant 17 : i32
    %145 = tpu.dynamic_rotate %144 by %c17_i32_107 dim 1 : vector<4x256xf32>, i32 -> vector<4x256xf32>
    %c0_108 = arith.constant 0 : index
    %c0_109 = arith.constant 0 : index
    %c0_110 = arith.constant 0 : index
    %146 = vector.load %arg2[%c0_108, %c0_109, %c0_110] : memref<9x1x256xf32, #tpu.memory_space<vmem>>, vector<1x1x256xf32>
    %147 = vector.shape_cast %146 : vector<1x1x256xf32> to vector<1x256xf32>
    %148 = vector.broadcast %147 : vector<1x256xf32> to vector<4x256xf32>
    %149 = arith.mulf %145, %148 : vector<4x256xf32>
    %c16_i32_111 = arith.constant 16 : i32
    %150 = tpu.dynamic_rotate %144 by %c16_i32_111 dim 1 : vector<4x256xf32>, i32 -> vector<4x256xf32>
    %c1_112 = arith.constant 1 : index
    %c0_113 = arith.constant 0 : index
    %c0_114 = arith.constant 0 : index
    %151 = vector.load %arg2[%c1_112, %c0_113, %c0_114] : memref<9x1x256xf32, #tpu.memory_space<vmem>>, vector<1x1x256xf32>
    %152 = vector.shape_cast %151 : vector<1x1x256xf32> to vector<1x256xf32>
    %153 = vector.broadcast %152 : vector<1x256xf32> to vector<4x256xf32>
    %154 = arith.mulf %150, %153 : vector<4x256xf32>
    %c15_i32_115 = arith.constant 15 : i32
    %155 = tpu.dynamic_rotate %144 by %c15_i32_115 dim 1 : vector<4x256xf32>, i32 -> vector<4x256xf32>
    %c2_116 = arith.constant 2 : index
    %c0_117 = arith.constant 0 : index
    %c0_118 = arith.constant 0 : index
    %156 = vector.load %arg2[%c2_116, %c0_117, %c0_118] : memref<9x1x256xf32, #tpu.memory_space<vmem>>, vector<1x1x256xf32>
    %157 = vector.shape_cast %156 : vector<1x1x256xf32> to vector<1x256xf32>
    %158 = vector.broadcast %157 : vector<1x256xf32> to vector<4x256xf32>
    %159 = arith.mulf %155, %158 : vector<4x256xf32>
    %c1_i32_119 = arith.constant 1 : i32
    %160 = tpu.dynamic_rotate %144 by %c1_i32_119 dim 1 : vector<4x256xf32>, i32 -> vector<4x256xf32>
    %c3_120 = arith.constant 3 : index
    %c0_121 = arith.constant 0 : index
    %c0_122 = arith.constant 0 : index
    %161 = vector.load %arg2[%c3_120, %c0_121, %c0_122] : memref<9x1x256xf32, #tpu.memory_space<vmem>>, vector<1x1x256xf32>
    %162 = vector.shape_cast %161 : vector<1x1x256xf32> to vector<1x256xf32>
    %163 = vector.broadcast %162 : vector<1x256xf32> to vector<4x256xf32>
    %164 = arith.mulf %160, %163 : vector<4x256xf32>
    %c4_123 = arith.constant 4 : index
    %c0_124 = arith.constant 0 : index
    %c0_125 = arith.constant 0 : index
    %165 = vector.load %arg2[%c4_123, %c0_124, %c0_125] : memref<9x1x256xf32, #tpu.memory_space<vmem>>, vector<1x1x256xf32>
    %166 = vector.shape_cast %165 : vector<1x1x256xf32> to vector<1x256xf32>
    %167 = vector.broadcast %166 : vector<1x256xf32> to vector<4x256xf32>
    %168 = arith.mulf %144, %167 : vector<4x256xf32>
    %c255_i32_126 = arith.constant 255 : i32
    %169 = tpu.dynamic_rotate %144 by %c255_i32_126 dim 1 : vector<4x256xf32>, i32 -> vector<4x256xf32>
    %c5_127 = arith.constant 5 : index
    %c0_128 = arith.constant 0 : index
    %c0_129 = arith.constant 0 : index
    %170 = vector.load %arg2[%c5_127, %c0_128, %c0_129] : memref<9x1x256xf32, #tpu.memory_space<vmem>>, vector<1x1x256xf32>
    %171 = vector.shape_cast %170 : vector<1x1x256xf32> to vector<1x256xf32>
    %172 = vector.broadcast %171 : vector<1x256xf32> to vector<4x256xf32>
    %173 = arith.mulf %169, %172 : vector<4x256xf32>
    %c241_i32_130 = arith.constant 241 : i32
    %174 = tpu.dynamic_rotate %144 by %c241_i32_130 dim 1 : vector<4x256xf32>, i32 -> vector<4x256xf32>
    %c6_131 = arith.constant 6 : index
    %c0_132 = arith.constant 0 : index
    %c0_133 = arith.constant 0 : index
    %175 = vector.load %arg2[%c6_131, %c0_132, %c0_133] : memref<9x1x256xf32, #tpu.memory_space<vmem>>, vector<1x1x256xf32>
    %176 = vector.shape_cast %175 : vector<1x1x256xf32> to vector<1x256xf32>
    %177 = vector.broadcast %176 : vector<1x256xf32> to vector<4x256xf32>
    %178 = arith.mulf %174, %177 : vector<4x256xf32>
    %c240_i32_134 = arith.constant 240 : i32
    %179 = tpu.dynamic_rotate %144 by %c240_i32_134 dim 1 : vector<4x256xf32>, i32 -> vector<4x256xf32>
    %c7_135 = arith.constant 7 : index
    %c0_136 = arith.constant 0 : index
    %c0_137 = arith.constant 0 : index
    %180 = vector.load %arg2[%c7_135, %c0_136, %c0_137] : memref<9x1x256xf32, #tpu.memory_space<vmem>>, vector<1x1x256xf32>
    %181 = vector.shape_cast %180 : vector<1x1x256xf32> to vector<1x256xf32>
    %182 = vector.broadcast %181 : vector<1x256xf32> to vector<4x256xf32>
    %183 = arith.mulf %179, %182 : vector<4x256xf32>
    %c239_i32_138 = arith.constant 239 : i32
    %184 = tpu.dynamic_rotate %144 by %c239_i32_138 dim 1 : vector<4x256xf32>, i32 -> vector<4x256xf32>
    %c8_139 = arith.constant 8 : index
    %c0_140 = arith.constant 0 : index
    %c0_141 = arith.constant 0 : index
    %185 = vector.load %arg2[%c8_139, %c0_140, %c0_141] : memref<9x1x256xf32, #tpu.memory_space<vmem>>, vector<1x1x256xf32>
    %186 = vector.shape_cast %185 : vector<1x1x256xf32> to vector<1x256xf32>
    %187 = vector.broadcast %186 : vector<1x256xf32> to vector<4x256xf32>
    %188 = arith.mulf %184, %187 : vector<4x256xf32>
    %cst_142 = arith.constant 0.000000e+00 : f32
    %189 = vector.broadcast %cst_142 : f32 to vector<8x256xf32>
    %c0_143 = arith.constant 0 : index
    %c0_144 = arith.constant 0 : index
    %c0_145 = arith.constant 0 : index
    %190 = vector.load %arg3[%c0_143, %c0_144, %c0_145] : memref<9x8x4xf32, #tpu.memory_space<vmem>>, vector<1x8x4xf32>
    %191 = vector.shape_cast %190 : vector<1x8x4xf32> to vector<8x4xf32>
    %cst_146 = arith.constant dense<0.000000e+00> : vector<8x256xf32>
    %192 = tpu.matmul %191, %149, %cst_146 {dimension_numbers = #tpu.dot_dimension_numbers<[1], [0], [0], [1], [0, 0, 1, 1], [], []>} : vector<8x4xf32>, vector<4x256xf32>, vector<8x256xf32> -> vector<8x256xf32>
    %193 = arith.addf %189, %192 : vector<8x256xf32>
    %c1_147 = arith.constant 1 : index
    %c0_148 = arith.constant 0 : index
    %c0_149 = arith.constant 0 : index
    %194 = vector.load %arg3[%c1_147, %c0_148, %c0_149] : memref<9x8x4xf32, #tpu.memory_space<vmem>>, vector<1x8x4xf32>
    %195 = vector.shape_cast %194 : vector<1x8x4xf32> to vector<8x4xf32>
    %cst_150 = arith.constant dense<0.000000e+00> : vector<8x256xf32>
    %196 = tpu.matmul %195, %154, %cst_150 {dimension_numbers = #tpu.dot_dimension_numbers<[1], [0], [0], [1], [0, 0, 1, 1], [], []>} : vector<8x4xf32>, vector<4x256xf32>, vector<8x256xf32> -> vector<8x256xf32>
    %197 = arith.addf %193, %196 : vector<8x256xf32>
    %c2_151 = arith.constant 2 : index
    %c0_152 = arith.constant 0 : index
    %c0_153 = arith.constant 0 : index
    %198 = vector.load %arg3[%c2_151, %c0_152, %c0_153] : memref<9x8x4xf32, #tpu.memory_space<vmem>>, vector<1x8x4xf32>
    %199 = vector.shape_cast %198 : vector<1x8x4xf32> to vector<8x4xf32>
    %cst_154 = arith.constant dense<0.000000e+00> : vector<8x256xf32>
    %200 = tpu.matmul %199, %159, %cst_154 {dimension_numbers = #tpu.dot_dimension_numbers<[1], [0], [0], [1], [0, 0, 1, 1], [], []>} : vector<8x4xf32>, vector<4x256xf32>, vector<8x256xf32> -> vector<8x256xf32>
    %201 = arith.addf %197, %200 : vector<8x256xf32>
    %c3_155 = arith.constant 3 : index
    %c0_156 = arith.constant 0 : index
    %c0_157 = arith.constant 0 : index
    %202 = vector.load %arg3[%c3_155, %c0_156, %c0_157] : memref<9x8x4xf32, #tpu.memory_space<vmem>>, vector<1x8x4xf32>
    %203 = vector.shape_cast %202 : vector<1x8x4xf32> to vector<8x4xf32>
    %cst_158 = arith.constant dense<0.000000e+00> : vector<8x256xf32>
    %204 = tpu.matmul %203, %164, %cst_158 {dimension_numbers = #tpu.dot_dimension_numbers<[1], [0], [0], [1], [0, 0, 1, 1], [], []>} : vector<8x4xf32>, vector<4x256xf32>, vector<8x256xf32> -> vector<8x256xf32>
    %205 = arith.addf %201, %204 : vector<8x256xf32>
    %c4_159 = arith.constant 4 : index
    %c0_160 = arith.constant 0 : index
    %c0_161 = arith.constant 0 : index
    %206 = vector.load %arg3[%c4_159, %c0_160, %c0_161] : memref<9x8x4xf32, #tpu.memory_space<vmem>>, vector<1x8x4xf32>
    %207 = vector.shape_cast %206 : vector<1x8x4xf32> to vector<8x4xf32>
    %cst_162 = arith.constant dense<0.000000e+00> : vector<8x256xf32>
    %208 = tpu.matmul %207, %168, %cst_162 {dimension_numbers = #tpu.dot_dimension_numbers<[1], [0], [0], [1], [0, 0, 1, 1], [], []>} : vector<8x4xf32>, vector<4x256xf32>, vector<8x256xf32> -> vector<8x256xf32>
    %209 = arith.addf %205, %208 : vector<8x256xf32>
    %c5_163 = arith.constant 5 : index
    %c0_164 = arith.constant 0 : index
    %c0_165 = arith.constant 0 : index
    %210 = vector.load %arg3[%c5_163, %c0_164, %c0_165] : memref<9x8x4xf32, #tpu.memory_space<vmem>>, vector<1x8x4xf32>
    %211 = vector.shape_cast %210 : vector<1x8x4xf32> to vector<8x4xf32>
    %cst_166 = arith.constant dense<0.000000e+00> : vector<8x256xf32>
    %212 = tpu.matmul %211, %173, %cst_166 {dimension_numbers = #tpu.dot_dimension_numbers<[1], [0], [0], [1], [0, 0, 1, 1], [], []>} : vector<8x4xf32>, vector<4x256xf32>, vector<8x256xf32> -> vector<8x256xf32>
    %213 = arith.addf %209, %212 : vector<8x256xf32>
    %c6_167 = arith.constant 6 : index
    %c0_168 = arith.constant 0 : index
    %c0_169 = arith.constant 0 : index
    %214 = vector.load %arg3[%c6_167, %c0_168, %c0_169] : memref<9x8x4xf32, #tpu.memory_space<vmem>>, vector<1x8x4xf32>
    %215 = vector.shape_cast %214 : vector<1x8x4xf32> to vector<8x4xf32>
    %cst_170 = arith.constant dense<0.000000e+00> : vector<8x256xf32>
    %216 = tpu.matmul %215, %178, %cst_170 {dimension_numbers = #tpu.dot_dimension_numbers<[1], [0], [0], [1], [0, 0, 1, 1], [], []>} : vector<8x4xf32>, vector<4x256xf32>, vector<8x256xf32> -> vector<8x256xf32>
    %217 = arith.addf %213, %216 : vector<8x256xf32>
    %c7_171 = arith.constant 7 : index
    %c0_172 = arith.constant 0 : index
    %c0_173 = arith.constant 0 : index
    %218 = vector.load %arg3[%c7_171, %c0_172, %c0_173] : memref<9x8x4xf32, #tpu.memory_space<vmem>>, vector<1x8x4xf32>
    %219 = vector.shape_cast %218 : vector<1x8x4xf32> to vector<8x4xf32>
    %cst_174 = arith.constant dense<0.000000e+00> : vector<8x256xf32>
    %220 = tpu.matmul %219, %183, %cst_174 {dimension_numbers = #tpu.dot_dimension_numbers<[1], [0], [0], [1], [0, 0, 1, 1], [], []>} : vector<8x4xf32>, vector<4x256xf32>, vector<8x256xf32> -> vector<8x256xf32>
    %221 = arith.addf %217, %220 : vector<8x256xf32>
    %c8_175 = arith.constant 8 : index
    %c0_176 = arith.constant 0 : index
    %c0_177 = arith.constant 0 : index
    %222 = vector.load %arg3[%c8_175, %c0_176, %c0_177] : memref<9x8x4xf32, #tpu.memory_space<vmem>>, vector<1x8x4xf32>
    %223 = vector.shape_cast %222 : vector<1x8x4xf32> to vector<8x4xf32>
    %cst_178 = arith.constant dense<0.000000e+00> : vector<8x256xf32>
    %224 = tpu.matmul %223, %188, %cst_178 {dimension_numbers = #tpu.dot_dimension_numbers<[1], [0], [0], [1], [0, 0, 1, 1], [], []>} : vector<8x4xf32>, vector<4x256xf32>, vector<8x256xf32> -> vector<8x256xf32>
    %225 = arith.addf %221, %224 : vector<8x256xf32>
    %c0_179 = arith.constant 0 : index
    %c0_180 = arith.constant 0 : index
    %226 = vector.load %arg4[%c0_179, %c0_180] : memref<8x1xf32, #tpu.memory_space<vmem>>, vector<8x1xf32>
    %227 = vector.broadcast %226 : vector<8x1xf32> to vector<8x256xf32>
    %228 = arith.addf %225, %227 : vector<8x256xf32>
    %cst_181 = arith.constant 0.000000e+00 : f32
    %229 = vector.broadcast %cst_181 : f32 to vector<8x256xf32>
    %230 = arith.maximumf %228, %229 : vector<8x256xf32>
    %c17_i32_182 = arith.constant 17 : i32
    %231 = tpu.dynamic_rotate %230 by %c17_i32_182 dim 1 : vector<8x256xf32>, i32 -> vector<8x256xf32>
    %c0_183 = arith.constant 0 : index
    %c0_184 = arith.constant 0 : index
    %c0_185 = arith.constant 0 : index
    %232 = vector.load %arg2[%c0_183, %c0_184, %c0_185] : memref<9x1x256xf32, #tpu.memory_space<vmem>>, vector<1x1x256xf32>
    %233 = vector.shape_cast %232 : vector<1x1x256xf32> to vector<1x256xf32>
    %234 = vector.broadcast %233 : vector<1x256xf32> to vector<8x256xf32>
    %235 = arith.mulf %231, %234 : vector<8x256xf32>
    %c16_i32_186 = arith.constant 16 : i32
    %236 = tpu.dynamic_rotate %230 by %c16_i32_186 dim 1 : vector<8x256xf32>, i32 -> vector<8x256xf32>
    %c1_187 = arith.constant 1 : index
    %c0_188 = arith.constant 0 : index
    %c0_189 = arith.constant 0 : index
    %237 = vector.load %arg2[%c1_187, %c0_188, %c0_189] : memref<9x1x256xf32, #tpu.memory_space<vmem>>, vector<1x1x256xf32>
    %238 = vector.shape_cast %237 : vector<1x1x256xf32> to vector<1x256xf32>
    %239 = vector.broadcast %238 : vector<1x256xf32> to vector<8x256xf32>
    %240 = arith.mulf %236, %239 : vector<8x256xf32>
    %c15_i32_190 = arith.constant 15 : i32
    %241 = tpu.dynamic_rotate %230 by %c15_i32_190 dim 1 : vector<8x256xf32>, i32 -> vector<8x256xf32>
    %c2_191 = arith.constant 2 : index
    %c0_192 = arith.constant 0 : index
    %c0_193 = arith.constant 0 : index
    %242 = vector.load %arg2[%c2_191, %c0_192, %c0_193] : memref<9x1x256xf32, #tpu.memory_space<vmem>>, vector<1x1x256xf32>
    %243 = vector.shape_cast %242 : vector<1x1x256xf32> to vector<1x256xf32>
    %244 = vector.broadcast %243 : vector<1x256xf32> to vector<8x256xf32>
    %245 = arith.mulf %241, %244 : vector<8x256xf32>
    %c1_i32_194 = arith.constant 1 : i32
    %246 = tpu.dynamic_rotate %230 by %c1_i32_194 dim 1 : vector<8x256xf32>, i32 -> vector<8x256xf32>
    %c3_195 = arith.constant 3 : index
    %c0_196 = arith.constant 0 : index
    %c0_197 = arith.constant 0 : index
    %247 = vector.load %arg2[%c3_195, %c0_196, %c0_197] : memref<9x1x256xf32, #tpu.memory_space<vmem>>, vector<1x1x256xf32>
    %248 = vector.shape_cast %247 : vector<1x1x256xf32> to vector<1x256xf32>
    %249 = vector.broadcast %248 : vector<1x256xf32> to vector<8x256xf32>
    %250 = arith.mulf %246, %249 : vector<8x256xf32>
    %c4_198 = arith.constant 4 : index
    %c0_199 = arith.constant 0 : index
    %c0_200 = arith.constant 0 : index
    %251 = vector.load %arg2[%c4_198, %c0_199, %c0_200] : memref<9x1x256xf32, #tpu.memory_space<vmem>>, vector<1x1x256xf32>
    %252 = vector.shape_cast %251 : vector<1x1x256xf32> to vector<1x256xf32>
    %253 = vector.broadcast %252 : vector<1x256xf32> to vector<8x256xf32>
    %254 = arith.mulf %230, %253 : vector<8x256xf32>
    %c255_i32_201 = arith.constant 255 : i32
    %255 = tpu.dynamic_rotate %230 by %c255_i32_201 dim 1 : vector<8x256xf32>, i32 -> vector<8x256xf32>
    %c5_202 = arith.constant 5 : index
    %c0_203 = arith.constant 0 : index
    %c0_204 = arith.constant 0 : index
    %256 = vector.load %arg2[%c5_202, %c0_203, %c0_204] : memref<9x1x256xf32, #tpu.memory_space<vmem>>, vector<1x1x256xf32>
    %257 = vector.shape_cast %256 : vector<1x1x256xf32> to vector<1x256xf32>
    %258 = vector.broadcast %257 : vector<1x256xf32> to vector<8x256xf32>
    %259 = arith.mulf %255, %258 : vector<8x256xf32>
    %c241_i32_205 = arith.constant 241 : i32
    %260 = tpu.dynamic_rotate %230 by %c241_i32_205 dim 1 : vector<8x256xf32>, i32 -> vector<8x256xf32>
    %c6_206 = arith.constant 6 : index
    %c0_207 = arith.constant 0 : index
    %c0_208 = arith.constant 0 : index
    %261 = vector.load %arg2[%c6_206, %c0_207, %c0_208] : memref<9x1x256xf32, #tpu.memory_space<vmem>>, vector<1x1x256xf32>
    %262 = vector.shape_cast %261 : vector<1x1x256xf32> to vector<1x256xf32>
    %263 = vector.broadcast %262 : vector<1x256xf32> to vector<8x256xf32>
    %264 = arith.mulf %260, %263 : vector<8x256xf32>
    %c240_i32_209 = arith.constant 240 : i32
    %265 = tpu.dynamic_rotate %230 by %c240_i32_209 dim 1 : vector<8x256xf32>, i32 -> vector<8x256xf32>
    %c7_210 = arith.constant 7 : index
    %c0_211 = arith.constant 0 : index
    %c0_212 = arith.constant 0 : index
    %266 = vector.load %arg2[%c7_210, %c0_211, %c0_212] : memref<9x1x256xf32, #tpu.memory_space<vmem>>, vector<1x1x256xf32>
    %267 = vector.shape_cast %266 : vector<1x1x256xf32> to vector<1x256xf32>
    %268 = vector.broadcast %267 : vector<1x256xf32> to vector<8x256xf32>
    %269 = arith.mulf %265, %268 : vector<8x256xf32>
    %c239_i32_213 = arith.constant 239 : i32
    %270 = tpu.dynamic_rotate %230 by %c239_i32_213 dim 1 : vector<8x256xf32>, i32 -> vector<8x256xf32>
    %c8_214 = arith.constant 8 : index
    %c0_215 = arith.constant 0 : index
    %c0_216 = arith.constant 0 : index
    %271 = vector.load %arg2[%c8_214, %c0_215, %c0_216] : memref<9x1x256xf32, #tpu.memory_space<vmem>>, vector<1x1x256xf32>
    %272 = vector.shape_cast %271 : vector<1x1x256xf32> to vector<1x256xf32>
    %273 = vector.broadcast %272 : vector<1x256xf32> to vector<8x256xf32>
    %274 = arith.mulf %270, %273 : vector<8x256xf32>
    %275 = tpu.concatenate %235, %240, %245, %250, %254, %259, %264, %269, %274 in 0 : vector<8x256xf32>, vector<8x256xf32>, vector<8x256xf32>, vector<8x256xf32>, vector<8x256xf32>, vector<8x256xf32>, vector<8x256xf32>, vector<8x256xf32>, vector<8x256xf32> -> vector<72x256xf32>
    %c0_217 = arith.constant 0 : index
    %c0_218 = arith.constant 0 : index
    %276 = vector.load %arg5[%c0_217, %c0_218] : memref<8x72xf32, #tpu.memory_space<vmem>>, vector<8x72xf32>
    %cst_219 = arith.constant dense<0.000000e+00> : vector<8x256xf32>
    %277 = tpu.matmul %276, %275, %cst_219 {dimension_numbers = #tpu.dot_dimension_numbers<[1], [0], [0], [1], [0, 0, 1, 1], [], []>} : vector<8x72xf32>, vector<72x256xf32>, vector<8x256xf32> -> vector<8x256xf32>
    %c0_220 = arith.constant 0 : index
    %c0_221 = arith.constant 0 : index
    %278 = vector.load %arg6[%c0_220, %c0_221] : memref<8x1xf32, #tpu.memory_space<vmem>>, vector<8x1xf32>
    %279 = vector.broadcast %278 : vector<8x1xf32> to vector<8x256xf32>
    %280 = arith.addf %277, %279 : vector<8x256xf32>
    %cst_222 = arith.constant 0.000000e+00 : f32
    %281 = vector.broadcast %cst_222 : f32 to vector<8x256xf32>
    %282 = arith.maximumf %280, %281 : vector<8x256xf32>
    %c1_223 = arith.constant 1 : index
    %c0_224 = arith.constant 0 : index
    %c0_225 = arith.constant 0 : index
    %283 = vector.load %arg7[%c1_223, %c0_224, %c0_225] : memref<2x8x256xf32, #tpu.memory_space<vmem>>, vector<1x8x256xf32>
    %284 = vector.shape_cast %283 : vector<1x8x256xf32> to vector<8x256xf32>
    %285 = vector.shape_cast %282 : vector<8x256xf32> to vector<1x8x256xf32>
    tpu.vector_store %arg7[%c1_223, %c0_224, %c0_225], %285 {strides = array<i32>} : memref<2x8x256xf32, #tpu.memory_space<vmem>>, vector<1x8x256xf32>,
    return
  }
  func.func @transform_0(%arg0: i32) -> (i32, i32, i32) {
    %c0_i32 = arith.constant 0 : i32
    %c0_i32_0 = arith.constant 0 : i32
    %c0_i32_1 = arith.constant 0 : i32
    return %arg0, %c0_i32, %c0_i32_0 : i32, i32, i32
  }
  func.func @transform_1(%arg0: i32) -> (i32, i32, i32) {
    %c0_i32 = arith.constant 0 : i32
    %c0_i32_0 = arith.constant 0 : i32
    %c0_i32_1 = arith.constant 0 : i32
    %c0_i32_2 = arith.constant 0 : i32
    return %c0_i32, %c0_i32_0, %c0_i32_1 : i32, i32, i32
  }
  func.func @transform_2(%arg0: i32) -> (i32, i32, i32) {
    %c0_i32 = arith.constant 0 : i32
    %c0_i32_0 = arith.constant 0 : i32
    %c0_i32_1 = arith.constant 0 : i32
    %c0_i32_2 = arith.constant 0 : i32
    return %c0_i32, %c0_i32_0, %c0_i32_1 : i32, i32, i32
  }
  func.func @transform_3(%arg0: i32) -> (i32, i32) {
    %c0_i32 = arith.constant 0 : i32
    %c0_i32_0 = arith.constant 0 : i32
    %c0_i32_1 = arith.constant 0 : i32
    return %c0_i32, %c0_i32_0 : i32, i32
  }
  func.func @transform_4(%arg0: i32) -> (i32, i32) {
    %c0_i32 = arith.constant 0 : i32
    %c0_i32_0 = arith.constant 0 : i32
    %c0_i32_1 = arith.constant 0 : i32
    return %c0_i32, %c0_i32_0 : i32, i32
  }
  func.func @transform_5(%arg0: i32) -> (i32, i32) {
    %c0_i32 = arith.constant 0 : i32
    %c0_i32_0 = arith.constant 0 : i32
    %c0_i32_1 = arith.constant 0 : i32
    return %c0_i32, %c0_i32_0 : i32, i32
  }
  func.func @transform_6(%arg0: i32) -> (i32, i32, i32) {
    %c0_i32 = arith.constant 0 : i32
    %c0_i32_0 = arith.constant 0 : i32
    %c0_i32_1 = arith.constant 0 : i32
    return %arg0, %c0_i32, %c0_i32_0 : i32, i32, i32
  }
}

</mosaic_0001>

<llo_original>
// kernel: tpu_custom_call.1
$region0: #{tpu_custom_call.1}
  #allocation0 [shape = 'u32[]', space=smem, size = 0x4, offset = 0x4, fixed_abs, tag = 'smem constant byte address 0x4 - core index']
  #allocation1 [shape = 'u32[144,128]{1,0:T(1,128)}', space=vmem, size = 0x12000, scoped, tag = 'internal scratch']
  %s0 = inlined_call_operand.vmem [shape: f32[2,4,256], index: 0, kind: input, shape index: {}]
  %s1 = inlined_call_operand.vmem [shape: f32[9,1,256], index: 1, kind: input, shape index: {}]
  %s2 = inlined_call_operand.vmem [shape: f32[9,8,4], index: 2, kind: input, shape index: {}]
  %s3 = inlined_call_operand.vmem [shape: f32[8,1], index: 3, kind: input, shape index: {}]
  %s4 = inlined_call_operand.vmem [shape: f32[8,72], index: 4, kind: input, shape index: {}]
  %s5 = inlined_call_operand.vmem [shape: f32[8,1], index: 5, kind: input, shape index: {}]
  %s6 = inlined_call_operand.hbm [shape: f32[2,8,256], index: 6, kind: output, shape index: {}]
  %s7 = sld [smem:[#allocation0]]
  $region34: #{tpu_custom_call.1} parent=0
    _
  %s9 = ssub.s32 1, %s7
  %s10 = scalar_select 0, %s9, %s7
  $region1: #{tpu_custom_call.1} parent=0
    #allocation2 [shape = 'u8[16384]{0}', space=vmem, size = 0x4000, scoped, tag = 'output window, operand 0, single buffered']
    #allocation3 [shape = 's32[1]{0}', space=sflag, size = 0x4, scoped, tag = 'scoped memory for tpu_custom_call.1']
    %11 = vsyncpa [#allocation3], 0
    // Predicated region
    $region2: #{tpu_custom_call.1} parent=1 // pred_check
      _
    $region3: #{tpu_custom_call.1} parent=1 // pred_check_branch
      %13 = sbr.rel (0) target = $region5
    $region4: #{tpu_custom_call.1} parent=1 // pred_region
      _
    $region5: #{tpu_custom_call.1} parent=1 // pred_fallthru
      _
    // Predicated region
    $region6: #{tpu_custom_call.1} parent=1 // pred_check
      _
    $region7: #{tpu_custom_call.1} parent=1 // pred_check_branch
      %15 = sbr.rel (0) target = $region9
    $region8: #{tpu_custom_call.1} parent=1 // pred_region
      _
    $region9: #{tpu_custom_call.1} parent=1 // pred_fallthru
      _
    // Predicated region
    $region10: #{tpu_custom_call.1} parent=1 // pred_check
      _
    $region11: #{tpu_custom_call.1} parent=1 // pred_check_branch
      %17 = sbr.rel (0) target = $region13
    $region12: #{tpu_custom_call.1} parent=1 // pred_region
      _
    $region13: #{tpu_custom_call.1} parent=1 // pred_fallthru
      _
    // Predicated region
    $region14: #{tpu_custom_call.1} parent=1 // pred_check
      _
    $region15: #{tpu_custom_call.1} parent=1 // pred_check_branch
      %19 = sbr.rel (0) target = $region17
    $region16: #{tpu_custom_call.1} parent=1 // pred_region
      _
    $region17: #{tpu_custom_call.1} parent=1 // pred_fallthru
      _
    // Predicated region
    $region18: #{tpu_custom_call.1} parent=1 // pred_check
      _
    $region19: #{tpu_custom_call.1} parent=1 // pred_check_branch
      %21 = sbr.rel (0) target = $region21
    $region20: #{tpu_custom_call.1} parent=1 // pred_region
      _
    $region21: #{tpu_custom_call.1} parent=1 // pred_fallthru
      _
    // Predicated region
    $region22: #{tpu_custom_call.1} parent=1 // pred_check
      _
    $region23: #{tpu_custom_call.1} parent=1 // pred_check_branch
      %23 = sbr.rel (0) target = $region25
    $region24: #{tpu_custom_call.1} parent=1 // pred_region
      _
    $region25: #{tpu_custom_call.1} parent=1 // pred_fallthru
      _
    %v24 = vld [vmem:[%s0] sm:$0xff]
    %v26 = vcombine.high %v24, %v24
    %28 = vrot.lane.b32.xlu0 %v24, 17
    %v29 = vpop.permute.xlu0 %28
    %30 = vrot.lane.b32.xlu0 %v26, 17
    %v31 = vpop.permute.xlu0 %30
    %v32 = vlaneseq
    %v33 = vand.u32 %v32, 127
    %vm34 = vcmp.lt.s32.totalorder %v33, 17
    %v35 = vsel %vm34, %v29, %v31
    %v36 = vsel %vm34, %v31, %v29
    %v37 = vld [vmem:[%s1] sm:$0x3]
    %v39 = vlaneseq
    %v40 = vshrl.u32 %v39, 7
    %v41 = vsub.s32 0, %v40
    %v42 = vrot.slane %v37, %v41
    %v43 = vlaneseq
    %v44 = vshrl.u32 %v43, 7
    %v45 = vsub.s32 1, %v44
    %v46 = vrot.slane %v37, %v45
    %v49 = vmul.f32 %v36, %v42
    %v50 = vmul.f32 %v35, %v46
    %51 = vrot.lane.b32.xlu0 %v24, 16
    %v52 = vpop.permute.xlu0 %51
    %53 = vrot.lane.b32.xlu0 %v26, 16
    %v54 = vpop.permute.xlu0 %53
    %vm55 = vcmp.lt.s32.totalorder %v33, 16
    %v56 = vsel %vm55, %v52, %v54
    %v57 = vsel %vm55, %v54, %v52
    %s58 = scalar_lea.vmem %s1, 2
    %v59 = vld [vmem:[%s58] sm:$0x3]
    %v61 = vlaneseq
    %v62 = vshrl.u32 %v61, 7
    %v63 = vsub.s32 0, %v62
    %v64 = vrot.slane %v59, %v63
    %v65 = vlaneseq
    %v66 = vshrl.u32 %v65, 7
    %v67 = vsub.s32 1, %v66
    %v68 = vrot.slane %v59, %v67
    %v71 = vmul.f32 %v57, %v64
    %v72 = vmul.f32 %v56, %v68
    %73 = vrot.lane.b32.xlu0 %v24, 15
    %v74 = vpop.permute.xlu0 %73
    %75 = vrot.lane.b32.xlu0 %v26, 15
    %v76 = vpop.permute.xlu0 %75
    %vm77 = vcmp.lt.s32.totalorder %v33, 15
    %v78 = vsel %vm77, %v74, %v76
    %v79 = vsel %vm77, %v76, %v74
    %s80 = scalar_lea.vmem %s1, 4
    %v81 = vld [vmem:[%s80] sm:$0x3]
    %v83 = vlaneseq
    %v84 = vshrl.u32 %v83, 7
    %v85 = vsub.s32 0, %v84
    %v86 = vrot.slane %v81, %v85
    %v87 = vlaneseq
    %v88 = vshrl.u32 %v87, 7
    %v89 = vsub.s32 1, %v88
    %v90 = vrot.slane %v81, %v89
    %v93 = vmul.f32 %v79, %v86
    %v94 = vmul.f32 %v78, %v90
    %95 = vrot.lane.b32.xlu0 %v24, 1
    %v96 = vpop.permute.xlu0 %95
    %97 = vrot.lane.b32.xlu0 %v26, 1
    %v98 = vpop.permute.xlu0 %97
    %vm99 = vcmp.lt.s32.totalorder %v33, 1
    %v100 = vsel %vm99, %v96, %v98
    %v101 = vsel %vm99, %v98, %v96
    %s102 = scalar_lea.vmem %s1, 6
    %v103 = vld [vmem:[%s102] sm:$0x3]
    %v105 = vlaneseq
    %v106 = vshrl.u32 %v105, 7
    %v107 = vsub.s32 0, %v106
    %v108 = vrot.slane %v103, %v107
    %v109 = vlaneseq
    %v110 = vshrl.u32 %v109, 7
    %v111 = vsub.s32 1, %v110
    %v112 = vrot.slane %v103, %v111
    %v115 = vmul.f32 %v101, %v108
    %v116 = vmul.f32 %v100, %v112
    %s117 = scalar_lea.vmem %s1, 8
    %v118 = vld [vmem:[%s117] sm:$0x3]
    %v120 = vlaneseq
    %v121 = vshrl.u32 %v120, 7
    %v122 = vsub.s32 0, %v121
    %v123 = vrot.slane %v118, %v122
    %v124 = vlaneseq
    %v125 = vshrl.u32 %v124, 7
    %v126 = vsub.s32 1, %v125
    %v127 = vrot.slane %v118, %v126
    %v128 = vcombine.low %v123, %v127
    %v130 = vmul.f32 %v24, %v128
    %131 = vrot.lane.b32.xlu0 %v24, 127
    %v132 = vpop.permute.xlu0 %131
    %133 = vrot.lane.b32.xlu0 %v26, 127
    %v134 = vpop.permute.xlu0 %133
    %vm135 = vcmp.lt.s32.totalorder %v33, 127
    %v136 = vsel %vm135, %v132, %v134
    %v137 = vsel %vm135, %v134, %v132
    %s138 = scalar_lea.vmem %s1, 10
    %v139 = vld [vmem:[%s138] sm:$0x3]
    %v141 = vlaneseq
    %v142 = vshrl.u32 %v141, 7
    %v143 = vsub.s32 0, %v142
    %v144 = vrot.slane %v139, %v143
    %v145 = vlaneseq
    %v146 = vshrl.u32 %v145, 7
    %v147 = vsub.s32 1, %v146
    %v148 = vrot.slane %v139, %v147
    %v151 = vmul.f32 %v136, %v144
    %v152 = vmul.f32 %v137, %v148
    %153 = vrot.lane.b32.xlu0 %v24, 113
    %v154 = vpop.permute.xlu0 %153
    %155 = vrot.lane.b32.xlu0 %v26, 113
    %v156 = vpop.permute.xlu0 %155
    %vm157 = vcmp.lt.s32.totalorder %v33, 113
    %v158 = vsel %vm157, %v154, %v156
    %v159 = vsel %vm157, %v156, %v154
    %s160 = scalar_lea.vmem %s1, 12
    %v161 = vld [vmem:[%s160] sm:$0x3]
    %v163 = vlaneseq
    %v164 = vshrl.u32 %v163, 7
    %v165 = vsub.s32 0, %v164
    %v166 = vrot.slane %v161, %v165
    %v167 = vlaneseq
    %v168 = vshrl.u32 %v167, 7
    %v169 = vsub.s32 1, %v168
    %v170 = vrot.slane %v161, %v169
    %v173 = vmul.f32 %v158, %v166
    %v174 = vmul.f32 %v159, %v170
    %175 = vrot.lane.b32.xlu0 %v24, 112
    %v176 = vpop.permute.xlu0 %175
    %177 = vrot.lane.b32.xlu0 %v26, 112
    %v178 = vpop.permute.xlu0 %177
    %vm179 = vcmp.lt.s32.totalorder %v33, 112
    %v180 = vsel %vm179, %v176, %v178
    %v181 = vsel %vm179, %v178, %v176
    %s182 = scalar_lea.vmem %s1, 14
    %v183 = vld [vmem:[%s182] sm:$0x3]
    %v185 = vlaneseq
    %v186 = vshrl.u32 %v185, 7
    %v187 = vsub.s32 0, %v186
    %v188 = vrot.slane %v183, %v187
    %v189 = vlaneseq
    %v190 = vshrl.u32 %v189, 7
    %v191 = vsub.s32 1, %v190
    %v192 = vrot.slane %v183, %v191
    %v195 = vmul.f32 %v180, %v188
    %v196 = vmul.f32 %v181, %v192
    %197 = vrot.lane.b32.xlu0 %v24, 111
    %v198 = vpop.permute.xlu0 %197
    %199 = vrot.lane.b32.xlu0 %v26, 111
    %v200 = vpop.permute.xlu0 %199
    %vm201 = vcmp.lt.s32.totalorder %v33, 111
    %v202 = vsel %vm201, %v198, %v200
    %v203 = vsel %vm201, %v200, %v198
    %s204 = scalar_lea.vmem %s1, 16
    %v205 = vld [vmem:[%s204] sm:$0x3]
    %v207 = vlaneseq
    %v208 = vshrl.u32 %v207, 7
    %v209 = vsub.s32 0, %v208
    %v210 = vrot.slane %v205, %v209
    %v211 = vlaneseq
    %v212 = vshrl.u32 %v211, 7
    %v213 = vsub.s32 1, %v212
    %v214 = vrot.slane %v205, %v213
    %v217 = vmul.f32 %v202, %v210
    %v218 = vmul.f32 %v203, %v214
    %v219 = vld [vmem:[%s2] sm:$0xff]
    %s220 = scalar_lea.vmem %s2, 8
    %v221 = vld [vmem:[%s220] sm:$0xff]
    %vm222 = vcmask 31744
    %v224 = vsel %vm222, %v221, 0
    %vm226 = vcmask 1043456
    %v228 = vsel %vm226, %v71, 0
    %v231 = vsel %vm226, %v72, 0
    %233 = vmatprep.subr.mxu0 %v231
    %234 = vmatpush1.msra.mxu0 %v228
    %235 = vmatprep.subr.mxu0 0.0
    %236 = vmatpush1.msra.mxu0 0.0
    %237 = vmatprep.subr.mxu0 0.0
    %238 = vmatpush1.msra.mxu0 0.0
    %239 = vmatprep.subr.mxu0 0.0
    %240 = vmatpush1.msra.mxu0 0.0
    %241 = vmatprep.subr.mxu0 0.0
    %242 = vmatpush1.msra.mxu0 0.0
    %243 = vmatprep.subr.mxu0 0.0
    %244 = vmatpush1.msra.mxu0 0.0
    %245 = vmatprep.subr.mxu0 0.0
    %246 = vmatpush1.msra.mxu0 0.0
    %247 = vmatprep.subr.mxu0 0.0
    %248 = vmatpush1.msra.mxu0 0.0
    %249 = vmatprep.subr.mxu0 0.0
    %250 = vmatpush1.msra.mxu0 0.0
    %251 = vmatprep.subr.mxu0 0.0
    %252 = vmatpush1.msra.mxu0 0.0
    %253 = vmatprep.subr.mxu0 0.0
    %254 = vmatpush1.msra.mxu0 0.0
    %255 = vmatprep.subr.mxu0 0.0
    %256 = vmatpush1.msra.mxu0 0.0
    %257 = vmatprep.subr.mxu0 0.0
    %258 = vmatpush1.msra.mxu0 0.0
    %259 = vmatprep.subr.mxu0 0.0
    %260 = vmatpush1.msra.mxu0 0.0
    %261 = vmatprep.subr.mxu0 0.0
    %262 = vmatpush1.msra.mxu0 0.0
    %263 = vmatprep.subr.mxu0 0.0
    %264 = vmatpush1.msra.mxu0 0.0
    %265 = vmatprep.subr.mxu0 0.0
    %266 = vmatpush1.msra.mxu0 0.0
    %267 = vmatprep.subr.mxu0 0.0
    %268 = vmatpush1.msra.mxu0 0.0
    %269 = vmatprep.subr.mxu0 0.0
    %270 = vmatpush1.msra.mxu0 0.0
    %271 = vmatprep.subr.mxu0 0.0
    %272 = vmatpush1.msra.mxu0 0.0
    %273 = vmatprep.subr.mxu0 0.0
    %274 = vmatpush1.msra.mxu0 0.0
    %275 = vmatprep.subr.mxu0 0.0
    %276 = vmatpush1.msra.mxu0 0.0
    %277 = vmatprep.subr.mxu0 0.0
    %278 = vmatpush1.msra.mxu0 0.0
    %279 = vmatprep.subr.mxu0 0.0
    %280 = vmatpush1.msra.mxu0 0.0
    %281 = vmatprep.subr.mxu0 0.0
    %282 = vmatpush1.msra.mxu0 0.0
    %283 = vmatprep.subr.mxu0 0.0
    %284 = vmatpush1.msra.mxu0 0.0
    %285 = vmatprep.subr.mxu0 0.0
    %286 = vmatpush1.msra.mxu0 0.0
    %287 = vmatprep.subr.mxu0 0.0
    %288 = vmatpush1.msra.mxu0 0.0
    %289 = vmatprep.subr.mxu0 0.0
    %290 = vmatpush1.msra.mxu0 0.0
    %291 = vmatprep.subr.mxu0 0.0
    %292 = vmatpush1.msra.mxu0 0.0
    %293 = vmatprep.subr.mxu0 0.0
    %294 = vmatpush1.msra.mxu0 0.0
    %295 = vmatprep.subr.mxu0 0.0
    %296 = vmatpush1.msra.mxu0 0.0
    %297 = vmatprep.mubr.f32.mxu0 0.0
    %298 = vmatmul.mubr.f32.gmra.mrb[0].mxu0 %v224
    %v299 = vpop.f32.mrb[0].mxu0
    %v300 = vadd.f32 0.0, %v299
    %v301 = vpop.f32.mrb[0].mxu0
    %v302 = vadd.f32 0.0, %v301
    %303 = vdwg.mxu0
    %v305 = vsel %vm222, %v219, 0
    %v308 = vsel %vm226, %v49, 0
    %v311 = vsel %vm226, %v50, 0
    %313 = vmatprep.subr.mxu0 %v311
    %314 = vmatpush1.msra.mxu0 %v308
    %315 = vmatprep.subr.mxu0 0.0
    %316 = vmatpush1.msra.mxu0 0.0
    %317 = vmatprep.subr.mxu0 0.0
    %318 = vmatpush1.msra.mxu0 0.0
    %319 = vmatprep.subr.mxu0 0.0
    %320 = vmatpush1.msra.mxu0 0.0
    %321 = vmatprep.subr.mxu0 0.0
    %322 = vmatpush1.msra.mxu0 0.0
    %323 = vmatprep.subr.mxu0 0.0
    %324 = vmatpush1.msra.mxu0 0.0
    %325 = vmatprep.subr.mxu0 0.0
    %326 = vmatpush1.msra.mxu0 0.0
    %327 = vmatprep.subr.mxu0 0.0
    %328 = vmatpush1.msra.mxu0 0.0
    %329 = vmatprep.subr.mxu0 0.0
    %330 = vmatpush1.msra.mxu0 0.0
    %331 = vmatprep.subr.mxu0 0.0
    %332 = vmatpush1.msra.mxu0 0.0
    %333 = vmatprep.subr.mxu0 0.0
    %334 = vmatpush1.msra.mxu0 0.0
    %335 = vmatprep.subr.mxu0 0.0
    %336 = vmatpush1.msra.mxu0 0.0
    %337 = vmatprep.subr.mxu0 0.0
    %338 = vmatpush1.msra.mxu0 0.0
    %339 = vmatprep.subr.mxu0 0.0
    %340 = vmatpush1.msra.mxu0 0.0
    %341 = vmatprep.subr.mxu0 0.0
    %342 = vmatpush1.msra.mxu0 0.0
    %343 = vmatprep.subr.mxu0 0.0
    %344 = vmatpush1.msra.mxu0 0.0
    %345 = vmatprep.subr.mxu0 0.0
    %346 = vmatpush1.msra.mxu0 0.0
    %347 = vmatprep.subr.mxu0 0.0
    %348 = vmatpush1.msra.mxu0 0.0
    %349 = vmatprep.subr.mxu0 0.0
    %350 = vmatpush1.msra.mxu0 0.0
    %351 = vmatprep.subr.mxu0 0.0
    %352 = vmatpush1.msra.mxu0 0.0
    %353 = vmatprep.subr.mxu0 0.0
    %354 = vmatpush1.msra.mxu0 0.0
    %355 = vmatprep.subr.mxu0 0.0
    %356 = vmatpush1.msra.mxu0 0.0
    %357 = vmatprep.subr.mxu0 0.0
    %358 = vmatpush1.msra.mxu0 0.0
    %359 = vmatprep.subr.mxu0 0.0
    %360 = vmatpush1.msra.mxu0 0.0
    %361 = vmatprep.subr.mxu0 0.0
    %362 = vmatpush1.msra.mxu0 0.0
    %363 = vmatprep.subr.mxu0 0.0
    %364 = vmatpush1.msra.mxu0 0.0
    %365 = vmatprep.subr.mxu0 0.0
    %366 = vmatpush1.msra.mxu0 0.0
    %367 = vmatprep.subr.mxu0 0.0
    %368 = vmatpush1.msra.mxu0 0.0
    %369 = vmatprep.subr.mxu0 0.0
    %370 = vmatpush1.msra.mxu0 0.0
    %371 = vmatprep.subr.mxu0 0.0
    %372 = vmatpush1.msra.mxu0 0.0
    %373 = vmatprep.subr.mxu0 0.0
    %374 = vmatpush1.msra.mxu0 0.0
    %375 = vmatprep.subr.mxu0 0.0
    %376 = vmatpush1.msra.mxu0 0.0
    %377 = vmatprep.mubr.f32.mxu0 0.0
    %378 = vmatmul.mubr.f32.gmra.mrb[0].mxu0 %v305
    %v379 = vpop.f32.mrb[0].mxu0
    %v380 = vadd.f32 %v300, %v379
    %v381 = vpop.f32.mrb[0].mxu0
    %v382 = vadd.f32 %v302, %v381
    %383 = vdwg.mxu0
    %s384 = scalar_lea.vmem %s2, 16
    %v385 = vld [vmem:[%s384] sm:$0xff]
    %v387 = vsel %vm222, %v385, 0
    %v390 = vsel %vm226, %v93, 0
    %v393 = vsel %vm226, %v94, 0
    %395 = vmatprep.subr.mxu0 %v393
    %396 = vmatpush1.msra.mxu0 %v390
    %397 = vmatprep.subr.mxu0 0.0
    %398 = vmatpush1.msra.mxu0 0.0
    %399 = vmatprep.subr.mxu0 0.0
    %400 = vmatpush1.msra.mxu0 0.0
    %401 = vmatprep.subr.mxu0 0.0
    %402 = vmatpush1.msra.mxu0 0.0
    %403 = vmatprep.subr.mxu0 0.0
    %404 = vmatpush1.msra.mxu0 0.0
    %405 = vmatprep.subr.mxu0 0.0
    %406 = vmatpush1.msra.mxu0 0.0
    %407 = vmatprep.subr.mxu0 0.0
    %408 = vmatpush1.msra.mxu0 0.0
    %409 = vmatprep.subr.mxu0 0.0
    %410 = vmatpush1.msra.mxu0 0.0
    %411 = vmatprep.subr.mxu0 0.0
    %412 = vmatpush1.msra.mxu0 0.0
    %413 = vmatprep.subr.mxu0 0.0
    %414 = vmatpush1.msra.mxu0 0.0
    %415 = vmatprep.subr.mxu0 0.0
    %416 = vmatpush1.msra.mxu0 0.0
    %417 = vmatprep.subr.mxu0 0.0
    %418 = vmatpush1.msra.mxu0 0.0
    %419 = vmatprep.subr.mxu0 0.0
    %420 = vmatpush1.msra.mxu0 0.0
    %421 = vmatprep.subr.mxu0 0.0
    %422 = vmatpush1.msra.mxu0 0.0
    %423 = vmatprep.subr.mxu0 0.0
    %424 = vmatpush1.msra.mxu0 0.0
    %425 = vmatprep.subr.mxu0 0.0
    %426 = vmatpush1.msra.mxu0 0.0
    %427 = vmatprep.subr.mxu0 0.0
    %428 = vmatpush1.msra.mxu0 0.0
    %429 = vmatprep.subr.mxu0 0.0
    %430 = vmatpush1.msra.mxu0 0.0
    %431 = vmatprep.subr.mxu0 0.0
    %432 = vmatpush1.msra.mxu0 0.0
    %433 = vmatprep.subr.mxu0 0.0
    %434 = vmatpush1.msra.mxu0 0.0
    %435 = vmatprep.subr.mxu0 0.0
    %436 = vmatpush1.msra.mxu0 0.0
    %437 = vmatprep.subr.mxu0 0.0
    %438 = vmatpush1.msra.mxu0 0.0
    %439 = vmatprep.subr.mxu0 0.0
    %440 = vmatpush1.msra.mxu0 0.0
    %441 = vmatprep.subr.mxu0 0.0
    %442 = vmatpush1.msra.mxu0 0.0
    %443 = vmatprep.subr.mxu0 0.0
    %444 = vmatpush1.msra.mxu0 0.0
    %445 = vmatprep.subr.mxu0 0.0
    %446 = vmatpush1.msra.mxu0 0.0
    %447 = vmatprep.subr.mxu0 0.0
    %448 = vmatpush1.msra.mxu0 0.0
    %449 = vmatprep.subr.mxu0 0.0
    %450 = vmatpush1.msra.mxu0 0.0
    %451 = vmatprep.subr.mxu0 0.0
    %452 = vmatpush1.msra.mxu0 0.0
    %453 = vmatprep.subr.mxu0 0.0
    %454 = vmatpush1.msra.mxu0 0.0
    %455 = vmatprep.subr.mxu0 0.0
    %456 = vmatpush1.msra.mxu0 0.0
    %457 = vmatprep.subr.mxu0 0.0
    %458 = vmatpush1.msra.mxu0 0.0
    %459 = vmatprep.mubr.f32.mxu0 0.0
    %460 = vmatmul.mubr.f32.gmra.mrb[0].mxu0 %v387
    %v461 = vpop.f32.mrb[0].mxu0
    %v462 = vadd.f32 0.0, %v461
    %v463 = vpop.f32.mrb[0].mxu0
    %v464 = vadd.f32 0.0, %v463
    %465 = vdwg.mxu0
    %v466 = vadd.f32 %v380, %v462
    %v467 = vadd.f32 %v382, %v464
    %s468 = scalar_lea.vmem %s2, 24
    %v469 = vld [vmem:[%s468] sm:$0xff]
    %v471 = vsel %vm222, %v469, 0
    %v474 = vsel %vm226, %v115, 0
    %v477 = vsel %vm226, %v116, 0
    %479 = vmatprep.subr.mxu0 %v477
    %480 = vmatpush1.msra.mxu0 %v474
    %481 = vmatprep.subr.mxu0 0.0
    %482 = vmatpush1.msra.mxu0 0.0
    %483 = vmatprep.subr.mxu0 0.0
    %484 = vmatpush1.msra.mxu0 0.0
    %485 = vmatprep.subr.mxu0 0.0
    %486 = vmatpush1.msra.mxu0 0.0
    %487 = vmatprep.subr.mxu0 0.0
    %488 = vmatpush1.msra.mxu0 0.0
    %489 = vmatprep.subr.mxu0 0.0
    %490 = vmatpush1.msra.mxu0 0.0
    %491 = vmatprep.subr.mxu0 0.0
    %492 = vmatpush1.msra.mxu0 0.0
    %493 = vmatprep.subr.mxu0 0.0
    %494 = vmatpush1.msra.mxu0 0.0
    %495 = vmatprep.subr.mxu0 0.0
    %496 = vmatpush1.msra.mxu0 0.0
    %497 = vmatprep.subr.mxu0 0.0
    %498 = vmatpush1.msra.mxu0 0.0
    %499 = vmatprep.subr.mxu0 0.0
    %500 = vmatpush1.msra.mxu0 0.0
    %501 = vmatprep.subr.mxu0 0.0
    %502 = vmatpush1.msra.mxu0 0.0
    %503 = vmatprep.subr.mxu0 0.0
    %504 = vmatpush1.msra.mxu0 0.0
    %505 = vmatprep.subr.mxu0 0.0
    %506 = vmatpush1.msra.mxu0 0.0
    %507 = vmatprep.subr.mxu0 0.0
    %508 = vmatpush1.msra.mxu0 0.0
    %509 = vmatprep.subr.mxu0 0.0
    %510 = vmatpush1.msra.mxu0 0.0
    %511 = vmatprep.subr.mxu0 0.0
    %512 = vmatpush1.msra.mxu0 0.0
    %513 = vmatprep.subr.mxu0 0.0
    %514 = vmatpush1.msra.mxu0 0.0
    %515 = vmatprep.subr.mxu0 0.0
    %516 = vmatpush1.msra.mxu0 0.0
    %517 = vmatprep.subr.mxu0 0.0
    %518 = vmatpush1.msra.mxu0 0.0
    %519 = vmatprep.subr.mxu0 0.0
    %520 = vmatpush1.msra.mxu0 0.0
    %521 = vmatprep.subr.mxu0 0.0
    %522 = vmatpush1.msra.mxu0 0.0
    %523 = vmatprep.subr.mxu0 0.0
    %524 = vmatpush1.msra.mxu0 0.0
    %525 = vmatprep.subr.mxu0 0.0
    %526 = vmatpush1.msra.mxu0 0.0
    %527 = vmatprep.subr.mxu0 0.0
    %528 = vmatpush1.msra.mxu0 0.0
    %529 = vmatprep.subr.mxu0 0.0
    %530 = vmatpush1.msra.mxu0 0.0
    %531 = vmatprep.subr.mxu0 0.0
    %532 = vmatpush1.msra.mxu0 0.0
    %533 = vmatprep.subr.mxu0 0.0
    %534 = vmatpush1.msra.mxu0 0.0
    %535 = vmatprep.subr.mxu0 0.0
    %536 = vmatpush1.msra.mxu0 0.0
    %537 = vmatprep.subr.mxu0 0.0
    %538 = vmatpush1.msra.mxu0 0.0
    %539 = vmatprep.subr.mxu0 0.0
    %540 = vmatpush1.msra.mxu0 0.0
    %541 = vmatprep.subr.mxu0 0.0
    %542 = vmatpush1.msra.mxu0 0.0
    %543 = vmatprep.mubr.f32.mxu0 0.0
    %544 = vmatmul.mubr.f32.gmra.mrb[0].mxu0 %v471
    %v545 = vpop.f32.mrb[0].mxu0
    %v546 = vadd.f32 0.0, %v545
    %v547 = vpop.f32.mrb[0].mxu0
    %v548 = vadd.f32 0.0, %v547
    %549 = vdwg.mxu0
    %v550 = vadd.f32 %v466, %v546
    %v551 = vadd.f32 %v467, %v548
    %s552 = scalar_lea.vmem %s2, 32
    %v553 = vld [vmem:[%s552] sm:$0xff]
    %v555 = vcombine.high %v130, %v130
    %v557 = vsel %vm222, %v553, 0
    %v559 = vsel %vm226, %v130, 0
    %v561 = vsel %vm226, %v555, 0
    %563 = vmatprep.subr.mxu0 %v561
    %564 = vmatpush1.msra.mxu0 %v559
    %565 = vmatprep.subr.mxu0 0.0
    %566 = vmatpush1.msra.mxu0 0.0
    %567 = vmatprep.subr.mxu0 0.0
    %568 = vmatpush1.msra.mxu0 0.0
    %569 = vmatprep.subr.mxu0 0.0
    %570 = vmatpush1.msra.mxu0 0.0
    %571 = vmatprep.subr.mxu0 0.0
    %572 = vmatpush1.msra.mxu0 0.0
    %573 = vmatprep.subr.mxu0 0.0
    %574 = vmatpush1.msra.mxu0 0.0
    %575 = vmatprep.subr.mxu0 0.0
    %576 = vmatpush1.msra.mxu0 0.0
    %577 = vmatprep.subr.mxu0 0.0
    %578 = vmatpush1.msra.mxu0 0.0
    %579 = vmatprep.subr.mxu0 0.0
    %580 = vmatpush1.msra.mxu0 0.0
    %581 = vmatprep.subr.mxu0 0.0
    %582 = vmatpush1.msra.mxu0 0.0
    %583 = vmatprep.subr.mxu0 0.0
    %584 = vmatpush1.msra.mxu0 0.0
    %585 = vmatprep.subr.mxu0 0.0
    %586 = vmatpush1.msra.mxu0 0.0
    %587 = vmatprep.subr.mxu0 0.0
    %588 = vmatpush1.msra.mxu0 0.0
    %589 = vmatprep.subr.mxu0 0.0
    %590 = vmatpush1.msra.mxu0 0.0
    %591 = vmatprep.subr.mxu0 0.0
    %592 = vmatpush1.msra.mxu0 0.0
    %593 = vmatprep.subr.mxu0 0.0
    %594 = vmatpush1.msra.mxu0 0.0
    %595 = vmatprep.subr.mxu0 0.0
    %596 = vmatpush1.msra.mxu0 0.0
    %597 = vmatprep.subr.mxu0 0.0
    %598 = vmatpush1.msra.mxu0 0.0
    %599 = vmatprep.subr.mxu0 0.0
    %600 = vmatpush1.msra.mxu0 0.0
    %601 = vmatprep.subr.mxu0 0.0
    %602 = vmatpush1.msra.mxu0 0.0
    %603 = vmatprep.subr.mxu0 0.0
    %604 = vmatpush1.msra.mxu0 0.0
    %605 = vmatprep.subr.mxu0 0.0
    %606 = vmatpush1.msra.mxu0 0.0
    %607 = vmatprep.subr.mxu0 0.0
    %608 = vmatpush1.msra.mxu0 0.0
    %609 = vmatprep.subr.mxu0 0.0
    %610 = vmatpush1.msra.mxu0 0.0
    %611 = vmatprep.subr.mxu0 0.0
    %612 = vmatpush1.msra.mxu0 0.0
    %613 = vmatprep.subr.mxu0 0.0
    %614 = vmatpush1.msra.mxu0 0.0
    %615 = vmatprep.subr.mxu0 0.0
    %616 = vmatpush1.msra.mxu0 0.0
    %617 = vmatprep.subr.mxu0 0.0
    %618 = vmatpush1.msra.mxu0 0.0
    %619 = vmatprep.subr.mxu0 0.0
    %620 = vmatpush1.msra.mxu0 0.0
    %621 = vmatprep.subr.mxu0 0.0
    %622 = vmatpush1.msra.mxu0 0.0
    %623 = vmatprep.subr.mxu0 0.0
    %624 = vmatpush1.msra.mxu0 0.0
    %625 = vmatprep.subr.mxu0 0.0
    %626 = vmatpush1.msra.mxu0 0.0
    %627 = vmatprep.mubr.f32.mxu0 0.0
    %628 = vmatmul.mubr.f32.gmra.mrb[0].mxu0 %v557
    %v629 = vpop.f32.mrb[0].mxu0
    %v630 = vadd.f32 0.0, %v629
    %v631 = vpop.f32.mrb[0].mxu0
    %v632 = vadd.f32 0.0, %v631
    %633 = vdwg.mxu0
    %v634 = vadd.f32 %v550, %v630
    %v635 = vadd.f32 %v551, %v632
    %s636 = scalar_lea.vmem %s2, 40
    %v637 = vld [vmem:[%s636] sm:$0xff]
    %v639 = vsel %vm222, %v637, 0
    %v642 = vsel %vm226, %v151, 0
    %v645 = vsel %vm226, %v152, 0
    %647 = vmatprep.subr.mxu0 %v645
    %648 = vmatpush1.msra.mxu0 %v642
    %649 = vmatprep.subr.mxu0 0.0
    %650 = vmatpush1.msra.mxu0 0.0
    %651 = vmatprep.subr.mxu0 0.0
    %652 = vmatpush1.msra.mxu0 0.0
    %653 = vmatprep.subr.mxu0 0.0
    %654 = vmatpush1.msra.mxu0 0.0
    %655 = vmatprep.subr.mxu0 0.0
    %656 = vmatpush1.msra.mxu0 0.0
    %657 = vmatprep.subr.mxu0 0.0
    %658 = vmatpush1.msra.mxu0 0.0
    %659 = vmatprep.subr.mxu0 0.0
    %660 = vmatpush1.msra.mxu0 0.0
    %661 = vmatprep.subr.mxu0 0.0
    %662 = vmatpush1.msra.mxu0 0.0
    %663 = vmatprep.subr.mxu0 0.0
    %664 = vmatpush1.msra.mxu0 0.0
    %665 = vmatprep.subr.mxu0 0.0
    %666 = vmatpush1.msra.mxu0 0.0
    %667 = vmatprep.subr.mxu0 0.0
    %668 = vmatpush1.msra.mxu0 0.0
    %669 = vmatprep.subr.mxu0 0.0
    %670 = vmatpush1.msra.mxu0 0.0
    %671 = vmatprep.subr.mxu0 0.0
    %672 = vmatpush1.msra.mxu0 0.0
    %673 = vmatprep.subr.mxu0 0.0
    %674 = vmatpush1.msra.mxu0 0.0
    %675 = vmatprep.subr.mxu0 0.0
    %676 = vmatpush1.msra.mxu0 0.0
    %677 = vmatprep.subr.mxu0 0.0
    %678 = vmatpush1.msra.mxu0 0.0
    %679 = vmatprep.subr.mxu0 0.0
    %680 = vmatpush1.msra.mxu0 0.0
    %681 = vmatprep.subr.mxu0 0.0
    %682 = vmatpush1.msra.mxu0 0.0
    %683 = vmatprep.subr.mxu0 0.0
    %684 = vmatpush1.msra.mxu0 0.0
    %685 = vmatprep.subr.mxu0 0.0
    %686 = vmatpush1.msra.mxu0 0.0
    %687 = vmatprep.subr.mxu0 0.0
    %688 = vmatpush1.msra.mxu0 0.0
    %689 = vmatprep.subr.mxu0 0.0
    %690 = vmatpush1.msra.mxu0 0.0
    %691 = vmatprep.subr.mxu0 0.0
    %692 = vmatpush1.msra.mxu0 0.0
    %693 = vmatprep.subr.mxu0 0.0
    %694 = vmatpush1.msra.mxu0 0.0
    %695 = vmatprep.subr.mxu0 0.0
    %696 = vmatpush1.msra.mxu0 0.0
    %697 = vmatprep.subr.mxu0 0.0
    %698 = vmatpush1.msra.mxu0 0.0
    %699 = vmatprep.subr.mxu0 0.0
    %700 = vmatpush1.msra.mxu0 0.0
    %701 = vmatprep.subr.mxu0 0.0
    %702 = vmatpush1.msra.mxu0 0.0
    %703 = vmatprep.subr.mxu0 0.0
    %704 = vmatpush1.msra.mxu0 0.0
    %705 = vmatprep.subr.mxu0 0.0
    %706 = vmatpush1.msra.mxu0 0.0
    %707 = vmatprep.subr.mxu0 0.0
    %708 = vmatpush1.msra.mxu0 0.0
    %709 = vmatprep.subr.mxu0 0.0
    %710 = vmatpush1.msra.mxu0 0.0
    %711 = vmatprep.mubr.f32.mxu0 0.0
    %712 = vmatmul.mubr.f32.gmra.mrb[0].mxu0 %v639
    %v713 = vpop.f32.mrb[0].mxu0
    %v714 = vadd.f32 0.0, %v713
    %v715 = vpop.f32.mrb[0].mxu0
    %v716 = vadd.f32 0.0, %v715
    %717 = vdwg.mxu0
    %v718 = vadd.f32 %v634, %v714
    %v719 = vadd.f32 %v635, %v716
    %s720 = scalar_lea.vmem %s2, 48
    %v721 = vld [vmem:[%s720] sm:$0xff]
    %v723 = vsel %vm222, %v721, 0
    %v726 = vsel %vm226, %v173, 0
    %v729 = vsel %vm226, %v174, 0
    %731 = vmatprep.subr.mxu0 %v729
    %732 = vmatpush1.msra.mxu0 %v726
    %733 = vmatprep.subr.mxu0 0.0
    %734 = vmatpush1.msra.mxu0 0.0
    %735 = vmatprep.subr.mxu0 0.0
    %736 = vmatpush1.msra.mxu0 0.0
    %737 = vmatprep.subr.mxu0 0.0
    %738 = vmatpush1.msra.mxu0 0.0
    %739 = vmatprep.subr.mxu0 0.0
    %740 = vmatpush1.msra.mxu0 0.0
    %741 = vmatprep.subr.mxu0 0.0
    %742 = vmatpush1.msra.mxu0 0.0
    %743 = vmatprep.subr.mxu0 0.0
    %744 = vmatpush1.msra.mxu0 0.0
    %745 = vmatprep.subr.mxu0 0.0
    %746 = vmatpush1.msra.mxu0 0.0
    %747 = vmatprep.subr.mxu0 0.0
    %748 = vmatpush1.msra.mxu0 0.0
    %749 = vmatprep.subr.mxu0 0.0
    %750 = vmatpush1.msra.mxu0 0.0
    %751 = vmatprep.subr.mxu0 0.0
    %752 = vmatpush1.msra.mxu0 0.0
    %753 = vmatprep.subr.mxu0 0.0
    %754 = vmatpush1.msra.mxu0 0.0
    %755 = vmatprep.subr.mxu0 0.0
    %756 = vmatpush1.msra.mxu0 0.0
    %757 = vmatprep.subr.mxu0 0.0
    %758 = vmatpush1.msra.mxu0 0.0
    %759 = vmatprep.subr.mxu0 0.0
    %760 = vmatpush1.msra.mxu0 0.0
    %761 = vmatprep.subr.mxu0 0.0
    %762 = vmatpush1.msra.mxu0 0.0
    %763 = vmatprep.subr.mxu0 0.0
    %764 = vmatpush1.msra.mxu0 0.0
    %765 = vmatprep.subr.mxu0 0.0
    %766 = vmatpush1.msra.mxu0 0.0
    %767 = vmatprep.subr.mxu0 0.0
    %768 = vmatpush1.msra.mxu0 0.0
    %769 = vmatprep.subr.mxu0 0.0
    %770 = vmatpush1.msra.mxu0 0.0
    %771 = vmatprep.subr.mxu0 0.0
    %772 = vmatpush1.msra.mxu0 0.0
    %773 = vmatprep.subr.mxu0 0.0
    %774 = vmatpush1.msra.mxu0 0.0
    %775 = vmatprep.subr.mxu0 0.0
    %776 = vmatpush1.msra.mxu0 0.0
    %777 = vmatprep.subr.mxu0 0.0
    %778 = vmatpush1.msra.mxu0 0.0
    %779 = vmatprep.subr.mxu0 0.0
    %780 = vmatpush1.msra.mxu0 0.0
    %781 = vmatprep.subr.mxu0 0.0
    %782 = vmatpush1.msra.mxu0 0.0
    %783 = vmatprep.subr.mxu0 0.0
    %784 = vmatpush1.msra.mxu0 0.0
    %785 = vmatprep.subr.mxu0 0.0
    %786 = vmatpush1.msra.mxu0 0.0
    %787 = vmatprep.subr.mxu0 0.0
    %788 = vmatpush1.msra.mxu0 0.0
    %789 = vmatprep.subr.mxu0 0.0
    %790 = vmatpush1.msra.mxu0 0.0
    %791 = vmatprep.subr.mxu0 0.0
    %792 = vmatpush1.msra.mxu0 0.0
    %793 = vmatprep.subr.mxu0 0.0
    %794 = vmatpush1.msra.mxu0 0.0
    %795 = vmatprep.mubr.f32.mxu0 0.0
    %796 = vmatmul.mubr.f32.gmra.mrb[0].mxu0 %v723
    %v797 = vpop.f32.mrb[0].mxu0
    %v798 = vadd.f32 0.0, %v797
    %v799 = vpop.f32.mrb[0].mxu0
    %v800 = vadd.f32 0.0, %v799
    %801 = vdwg.mxu0
    %v802 = vadd.f32 %v718, %v798
    %v803 = vadd.f32 %v719, %v800
    %s804 = scalar_lea.vmem %s2, 56
    %v805 = vld [vmem:[%s804] sm:$0xff]
    %v807 = vsel %vm222, %v805, 0
    %v810 = vsel %vm226, %v195, 0
    %v813 = vsel %vm226, %v196, 0
    %815 = vmatprep.subr.mxu0 %v813
    %816 = vmatpush1.msra.mxu0 %v810
    %817 = vmatprep.subr.mxu0 0.0
    %818 = vmatpush1.msra.mxu0 0.0
    %819 = vmatprep.subr.mxu0 0.0
    %820 = vmatpush1.msra.mxu0 0.0
    %821 = vmatprep.subr.mxu0 0.0
    %822 = vmatpush1.msra.mxu0 0.0
    %823 = vmatprep.subr.mxu0 0.0
    %824 = vmatpush1.msra.mxu0 0.0
    %825 = vmatprep.subr.mxu0 0.0
    %826 = vmatpush1.msra.mxu0 0.0
    %827 = vmatprep.subr.mxu0 0.0
    %828 = vmatpush1.msra.mxu0 0.0
    %829 = vmatprep.subr.mxu0 0.0
    %830 = vmatpush1.msra.mxu0 0.0
    %831 = vmatprep.subr.mxu0 0.0
    %832 = vmatpush1.msra.mxu0 0.0
    %833 = vmatprep.subr.mxu0 0.0
    %834 = vmatpush1.msra.mxu0 0.0
    %835 = vmatprep.subr.mxu0 0.0
    %836 = vmatpush1.msra.mxu0 0.0
    %837 = vmatprep.subr.mxu0 0.0
    %838 = vmatpush1.msra.mxu0 0.0
    %839 = vmatprep.subr.mxu0 0.0
    %840 = vmatpush1.msra.mxu0 0.0
    %841 = vmatprep.subr.mxu0 0.0
    %842 = vmatpush1.msra.mxu0 0.0
    %843 = vmatprep.subr.mxu0 0.0
    %844 = vmatpush1.msra.mxu0 0.0
    %845 = vmatprep.subr.mxu0 0.0
    %846 = vmatpush1.msra.mxu0 0.0
    %847 = vmatprep.subr.mxu0 0.0
    %848 = vmatpush1.msra.mxu0 0.0
    %849 = vmatprep.subr.mxu0 0.0
    %850 = vmatpush1.msra.mxu0 0.0
    %851 = vmatprep.subr.mxu0 0.0
    %852 = vmatpush1.msra.mxu0 0.0
    %853 = vmatprep.subr.mxu0 0.0
    %854 = vmatpush1.msra.mxu0 0.0
    %855 = vmatprep.subr.mxu0 0.0
    %856 = vmatpush1.msra.mxu0 0.0
    %857 = vmatprep.subr.mxu0 0.0
    %858 = vmatpush1.msra.mxu0 0.0
    %859 = vmatprep.subr.mxu0 0.0
    %860 = vmatpush1.msra.mxu0 0.0
    %861 = vmatprep.subr.mxu0 0.0
    %862 = vmatpush1.msra.mxu0 0.0
    %863 = vmatprep.subr.mxu0 0.0
    %864 = vmatpush1.msra.mxu0 0.0
    %865 = vmatprep.subr.mxu0 0.0
    %866 = vmatpush1.msra.mxu0 0.0
    %867 = vmatprep.subr.mxu0 0.0
    %868 = vmatpush1.msra.mxu0 0.0
    %869 = vmatprep.subr.mxu0 0.0
    %870 = vmatpush1.msra.mxu0 0.0
    %871 = vmatprep.subr.mxu0 0.0
    %872 = vmatpush1.msra.mxu0 0.0
    %873 = vmatprep.subr.mxu0 0.0
    %874 = vmatpush1.msra.mxu0 0.0
    %875 = vmatprep.subr.mxu0 0.0
    %876 = vmatpush1.msra.mxu0 0.0
    %877 = vmatprep.subr.mxu0 0.0
    %878 = vmatpush1.msra.mxu0 0.0
    %879 = vmatprep.mubr.f32.mxu0 0.0
    %880 = vmatmul.mubr.f32.gmra.mrb[0].mxu0 %v807
    %v881 = vpop.f32.mrb[0].mxu0
    %v882 = vadd.f32 0.0, %v881
    %v883 = vpop.f32.mrb[0].mxu0
    %v884 = vadd.f32 0.0, %v883
    %885 = vdwg.mxu0
    %v886 = vadd.f32 %v802, %v882
    %v887 = vadd.f32 %v803, %v884
    %s888 = scalar_lea.vmem %s2, 64
    %v889 = vld [vmem:[%s888] sm:$0xff]
    %v891 = vsel %vm222, %v889, 0
    %v894 = vsel %vm226, %v217, 0
    %v897 = vsel %vm226, %v218, 0
    %899 = vmatprep.subr.mxu0 %v897
    %900 = vmatpush1.msra.mxu0 %v894
    %901 = vmatprep.subr.mxu0 0.0
    %902 = vmatpush1.msra.mxu0 0.0
    %903 = vmatprep.subr.mxu0 0.0
    %904 = vmatpush1.msra.mxu0 0.0
    %905 = vmatprep.subr.mxu0 0.0
    %906 = vmatpush1.msra.mxu0 0.0
    %907 = vmatprep.subr.mxu0 0.0
    %908 = vmatpush1.msra.mxu0 0.0
    %909 = vmatprep.subr.mxu0 0.0
    %910 = vmatpush1.msra.mxu0 0.0
    %911 = vmatprep.subr.mxu0 0.0
    %912 = vmatpush1.msra.mxu0 0.0
    %913 = vmatprep.subr.mxu0 0.0
    %914 = vmatpush1.msra.mxu0 0.0
    %915 = vmatprep.subr.mxu0 0.0
    %916 = vmatpush1.msra.mxu0 0.0
    %917 = vmatprep.subr.mxu0 0.0
    %918 = vmatpush1.msra.mxu0 0.0
    %919 = vmatprep.subr.mxu0 0.0
    %920 = vmatpush1.msra.mxu0 0.0
    %921 = vmatprep.subr.mxu0 0.0
    %922 = vmatpush1.msra.mxu0 0.0
    %923 = vmatprep.subr.mxu0 0.0
    %924 = vmatpush1.msra.mxu0 0.0
    %925 = vmatprep.subr.mxu0 0.0
    %926 = vmatpush1.msra.mxu0 0.0
    %927 = vmatprep.subr.mxu0 0.0
    %928 = vmatpush1.msra.mxu0 0.0
    %929 = vmatprep.subr.mxu0 0.0
    %930 = vmatpush1.msra.mxu0 0.0
    %931 = vmatprep.subr.mxu0 0.0
    %932 = vmatpush1.msra.mxu0 0.0
    %933 = vmatprep.subr.mxu0 0.0
    %934 = vmatpush1.msra.mxu0 0.0
    %935 = vmatprep.subr.mxu0 0.0
    %936 = vmatpush1.msra.mxu0 0.0
    %937 = vmatprep.subr.mxu0 0.0
    %938 = vmatpush1.msra.mxu0 0.0
    %939 = vmatprep.subr.mxu0 0.0
    %940 = vmatpush1.msra.mxu0 0.0
    %941 = vmatprep.subr.mxu0 0.0
    %942 = vmatpush1.msra.mxu0 0.0
    %943 = vmatprep.subr.mxu0 0.0
    %944 = vmatpush1.msra.mxu0 0.0
    %945 = vmatprep.subr.mxu0 0.0
    %946 = vmatpush1.msra.mxu0 0.0
    %947 = vmatprep.subr.mxu0 0.0
    %948 = vmatpush1.msra.mxu0 0.0
    %949 = vmatprep.subr.mxu0 0.0
    %950 = vmatpush1.msra.mxu0 0.0
    %951 = vmatprep.subr.mxu0 0.0
    %952 = vmatpush1.msra.mxu0 0.0
    %953 = vmatprep.subr.mxu0 0.0
    %954 = vmatpush1.msra.mxu0 0.0
    %955 = vmatprep.subr.mxu0 0.0
    %956 = vmatpush1.msra.mxu0 0.0
    %957 = vmatprep.subr.mxu0 0.0
    %958 = vmatpush1.msra.mxu0 0.0
    %959 = vmatprep.subr.mxu0 0.0
    %960 = vmatpush1.msra.mxu0 0.0
    %961 = vmatprep.subr.mxu0 0.0
    %962 = vmatpush1.msra.mxu0 0.0
    %963 = vmatprep.mubr.f32.mxu0 0.0
    %964 = vmatmul.mubr.f32.gmra.mrb[0].mxu0 %v891
    %v965 = vpop.f32.mrb[0].mxu0
    %v966 = vadd.f32 0.0, %v965
    %v967 = vpop.f32.mrb[0].mxu0
    %v968 = vadd.f32 0.0, %v967
    %969 = vdwg.mxu0
    %v970 = vadd.f32 %v886, %v966
    %v971 = vadd.f32 %v887, %v968
    %v972 = vld [vmem:[%s3] sm:$0xff]
    %974 = vset.pattern.permute.xlu0 0
    %975 = vperm.xlu0 %974, %v972
    %v976 = vpop.permute.xlu0 %975
    %v978 = vadd.f32 %v970, %v976
    %v979 = vadd.f32 %v971, %v976
    %v980 = vmax.f32 %v978, 0.0
    %v981 = vmax.f32 %v979, 0.0
    %982 = vrot.lane.b32.xlu0 %v980, 17
    %v983 = vpop.permute.xlu0 %982
    %984 = vrot.lane.b32.xlu0 %v981, 17
    %v985 = vpop.permute.xlu0 %984
    %v986 = vsel %vm34, %v983, %v985
    %v987 = vsel %vm34, %v985, %v983
    %v988 = vmul.f32 %v987, %v42
    %v989 = vmul.f32 %v986, %v46
    %990 = vrot.lane.b32.xlu0 %v980, 16
    %v991 = vpop.permute.xlu0 %990
    %992 = vrot.lane.b32.xlu0 %v981, 16
    %v993 = vpop.permute.xlu0 %992
    %v994 = vsel %vm55, %v991, %v993
    %v995 = vsel %vm55, %v993, %v991
    %v996 = vmul.f32 %v995, %v64
    %v997 = vmul.f32 %v994, %v68
    %998 = vrot.lane.b32.xlu0 %v980, 15
    %v999 = vpop.permute.xlu0 %998
    %1000 = vrot.lane.b32.xlu0 %v981, 15
    %v1001 = vpop.permute.xlu0 %1000
    %v1002 = vsel %vm77, %v999, %v1001
    %v1003 = vsel %vm77, %v1001, %v999
    %v1004 = vmul.f32 %v1003, %v86
    %v1005 = vmul.f32 %v1002, %v90
    %1006 = vrot.lane.b32.xlu0 %v980, 1
    %v1007 = vpop.permute.xlu0 %1006
    %1008 = vrot.lane.b32.xlu0 %v981, 1
    %v1009 = vpop.permute.xlu0 %1008
    %v1010 = vsel %vm99, %v1007, %v1009
    %v1011 = vsel %vm99, %v1009, %v1007
    %v1012 = vmul.f32 %v1011, %v108
    %v1013 = vmul.f32 %v1010, %v112
    %v1016 = vmul.f32 %v980, %v123
    %v1017 = vmul.f32 %v981, %v127
    %1018 = vrot.lane.b32.xlu0 %v980, 127
    %v1019 = vpop.permute.xlu0 %1018
    %1020 = vrot.lane.b32.xlu0 %v981, 127
    %v1021 = vpop.permute.xlu0 %1020
    %v1022 = vsel %vm135, %v1019, %v1021
    %v1023 = vsel %vm135, %v1021, %v1019
    %v1024 = vmul.f32 %v1022, %v144
    %v1025 = vmul.f32 %v1023, %v148
    %1026 = vrot.lane.b32.xlu0 %v980, 113
    %v1027 = vpop.permute.xlu0 %1026
    %1028 = vrot.lane.b32.xlu0 %v981, 113
    %v1029 = vpop.permute.xlu0 %1028
    %v1030 = vsel %vm157, %v1027, %v1029
    %v1031 = vsel %vm157, %v1029, %v1027
    %v1032 = vmul.f32 %v1030, %v166
    %v1033 = vmul.f32 %v1031, %v170
    %1034 = vrot.lane.b32.xlu0 %v980, 112
    %v1035 = vpop.permute.xlu0 %1034
    %1036 = vrot.lane.b32.xlu0 %v981, 112
    %v1037 = vpop.permute.xlu0 %1036
    %v1038 = vsel %vm179, %v1035, %v1037
    %v1039 = vsel %vm179, %v1037, %v1035
    %v1040 = vmul.f32 %v1038, %v188
    %v1041 = vmul.f32 %v1039, %v192
    %1042 = vrot.lane.b32.xlu0 %v980, 111
    %v1043 = vpop.permute.xlu0 %1042
    %1044 = vrot.lane.b32.xlu0 %v981, 111
    %v1045 = vpop.permute.xlu0 %1044
    %v1046 = vsel %vm201, %v1043, %v1045
    %v1047 = vsel %vm201, %v1045, %v1043
    %v1048 = vmul.f32 %v1046, %v210
    %v1049 = vmul.f32 %v1047, %v214
    %v1050 = vld [vmem:[%s4] sm:$0xff]
    %v1051 = vld [vmem:[%s5] sm:$0xff]
    %1053 = vset.pattern.permute.xlu0 0
    %1054 = vperm.xlu0 %1053, %v1051
    %v1055 = vpop.permute.xlu0 %1054
    %vm1057 = vcmask 588800
    %v1059 = vsel %vm1057, %v1050, 0
    %1061 = vmatprep.subr.mxu0 %v989
    %1062 = vmatpush1.msra.mxu0 %v988
    %1063 = vmatprep.subr.mxu0 %v997
    %1064 = vmatpush1.msra.mxu0 %v996
    %1065 = vmatprep.subr.mxu0 %v1005
    %1066 = vmatpush1.msra.mxu0 %v1004
    %1067 = vmatprep.subr.mxu0 %v1013
    %1068 = vmatpush1.msra.mxu0 %v1012
    %1069 = vmatprep.subr.mxu0 %v1017
    %1070 = vmatpush1.msra.mxu0 %v1016
    %1071 = vmatprep.subr.mxu0 %v1025
    %1072 = vmatpush1.msra.mxu0 %v1024
    %1073 = vmatprep.subr.mxu0 %v1033
    %1074 = vmatpush1.msra.mxu0 %v1032
    %1075 = vmatprep.subr.mxu0 %v1041
    %1076 = vmatpush1.msra.mxu0 %v1040
    %1077 = vmatprep.subr.mxu0 %v1049
    %1078 = vmatpush1.msra.mxu0 %v1048
    %1079 = vmatprep.subr.mxu0 0.0
    %1080 = vmatpush1.msra.mxu0 0.0
    %1081 = vmatprep.subr.mxu0 0.0
    %1082 = vmatpush1.msra.mxu0 0.0
    %1083 = vmatprep.subr.mxu0 0.0
    %1084 = vmatpush1.msra.mxu0 0.0
    %1085 = vmatprep.subr.mxu0 0.0
    %1086 = vmatpush1.msra.mxu0 0.0
    %1087 = vmatprep.subr.mxu0 0.0
    %1088 = vmatpush1.msra.mxu0 0.0
    %1089 = vmatprep.subr.mxu0 0.0
    %1090 = vmatpush1.msra.mxu0 0.0
    %1091 = vmatprep.subr.mxu0 0.0
    %1092 = vmatpush1.msra.mxu0 0.0
    %1093 = vmatprep.subr.mxu0 0.0
    %1094 = vmatpush1.msra.mxu0 0.0
    %1095 = vmatprep.subr.mxu0 0.0
    %1096 = vmatpush1.msra.mxu0 0.0
    %1097 = vmatprep.subr.mxu0 0.0
    %1098 = vmatpush1.msra.mxu0 0.0
    %1099 = vmatprep.subr.mxu0 0.0
    %1100 = vmatpush1.msra.mxu0 0.0
    %1101 = vmatprep.subr.mxu0 0.0
    %1102 = vmatpush1.msra.mxu0 0.0
    %1103 = vmatprep.subr.mxu0 0.0
    %1104 = vmatpush1.msra.mxu0 0.0
    %1105 = vmatprep.subr.mxu0 0.0
    %1106 = vmatpush1.msra.mxu0 0.0
    %1107 = vmatprep.subr.mxu0 0.0
    %1108 = vmatpush1.msra.mxu0 0.0
    %1109 = vmatprep.subr.mxu0 0.0
    %1110 = vmatpush1.msra.mxu0 0.0
    %1111 = vmatprep.subr.mxu0 0.0
    %1112 = vmatpush1.msra.mxu0 0.0
    %1113 = vmatprep.subr.mxu0 0.0
    %1114 = vmatpush1.msra.mxu0 0.0
    %1115 = vmatprep.subr.mxu0 0.0
    %1116 = vmatpush1.msra.mxu0 0.0
    %1117 = vmatprep.subr.mxu0 0.0
    %1118 = vmatpush1.msra.mxu0 0.0
    %1119 = vmatprep.subr.mxu0 0.0
    %1120 = vmatpush1.msra.mxu0 0.0
    %1121 = vmatprep.subr.mxu0 0.0
    %1122 = vmatpush1.msra.mxu0 0.0
    %1123 = vmatprep.subr.mxu0 0.0
    %1124 = vmatpush1.msra.mxu0 0.0
    %1125 = vmatprep.mubr.f32.mxu0 0.0
    %1126 = vmatmul.mubr.f32.gmra.mrb[0].mxu0 %v1059
    %v1127 = vpop.f32.mrb[0].mxu0
    %v1128 = vadd.f32 %v1055, %v1127
    %v1129 = vpop.f32.mrb[0].mxu0
    %v1130 = vadd.f32 %v1055, %v1129
    %1131 = vdwg.mxu0
    %v1132 = vmax.f32 %v1128, 0.0
    %v1133 = vmax.f32 %v1130, 0.0
    %1134 = vst [vmem:[#allocation2] sm:$0xff] %v1132
    %1135 = vst [vmem:[#allocation2 + $0x8] sm:$0xff] %v1133
    %s1136 = scalar_lea.vmem %s0, 8
    %v1137 = vld [vmem:[%s1136] sm:$0xff]
    %v1139 = vcombine.high %v1137, %v1137
    %1141 = vrot.lane.b32.xlu0 %v1137, 17
    %v1142 = vpop.permute.xlu0 %1141
    %1143 = vrot.lane.b32.xlu0 %v1139, 17
    %v1144 = vpop.permute.xlu0 %1143
    %v1145 = vsel %vm34, %v1142, %v1144
    %v1146 = vsel %vm34, %v1144, %v1142
    %v1147 = vld [vmem:[%s1] sm:$0x3]
    %v1149 = vlaneseq
    %v1150 = vshrl.u32 %v1149, 7
    %v1151 = vsub.s32 0, %v1150
    %v1152 = vrot.slane %v1147, %v1151
    %v1153 = vlaneseq
    %v1154 = vshrl.u32 %v1153, 7
    %v1155 = vsub.s32 1, %v1154
    %v1156 = vrot.slane %v1147, %v1155
    %v1159 = vmul.f32 %v1146, %v1152
    %v1160 = vmul.f32 %v1145, %v1156
    %1161 = vrot.lane.b32.xlu0 %v1137, 16
    %v1162 = vpop.permute.xlu0 %1161
    %1163 = vrot.lane.b32.xlu0 %v1139, 16
    %v1164 = vpop.permute.xlu0 %1163
    %v1165 = vsel %vm55, %v1162, %v1164
    %v1166 = vsel %vm55, %v1164, %v1162
    %v1167 = vld [vmem:[%s58] sm:$0x3]
    %v1169 = vlaneseq
    %v1170 = vshrl.u32 %v1169, 7
    %v1171 = vsub.s32 0, %v1170
    %v1172 = vrot.slane %v1167, %v1171
    %v1173 = vlaneseq
    %v1174 = vshrl.u32 %v1173, 7
    %v1175 = vsub.s32 1, %v1174
    %v1176 = vrot.slane %v1167, %v1175
    %v1179 = vmul.f32 %v1166, %v1172
    %v1180 = vmul.f32 %v1165, %v1176
    %1181 = vrot.lane.b32.xlu0 %v1137, 15
    %v1182 = vpop.permute.xlu0 %1181
    %1183 = vrot.lane.b32.xlu0 %v1139, 15
    %v1184 = vpop.permute.xlu0 %1183
    %v1185 = vsel %vm77, %v1182, %v1184
    %v1186 = vsel %vm77, %v1184, %v1182
    %v1187 = vld [vmem:[%s80] sm:$0x3]
    %v1189 = vlaneseq
    %v1190 = vshrl.u32 %v1189, 7
    %v1191 = vsub.s32 0, %v1190
    %v1192 = vrot.slane %v1187, %v1191
    %v1193 = vlaneseq
    %v1194 = vshrl.u32 %v1193, 7
    %v1195 = vsub.s32 1, %v1194
    %v1196 = vrot.slane %v1187, %v1195
    %v1199 = vmul.f32 %v1186, %v1192
    %v1200 = vmul.f32 %v1185, %v1196
    %1201 = vrot.lane.b32.xlu0 %v1137, 1
    %v1202 = vpop.permute.xlu0 %1201
    %1203 = vrot.lane.b32.xlu0 %v1139, 1
    %v1204 = vpop.permute.xlu0 %1203
    %v1205 = vsel %vm99, %v1202, %v1204
    %v1206 = vsel %vm99, %v1204, %v1202
    %v1207 = vld [vmem:[%s102] sm:$0x3]
    %v1209 = vlaneseq
    %v1210 = vshrl.u32 %v1209, 7
    %v1211 = vsub.s32 0, %v1210
    %v1212 = vrot.slane %v1207, %v1211
    %v1213 = vlaneseq
    %v1214 = vshrl.u32 %v1213, 7
    %v1215 = vsub.s32 1, %v1214
    %v1216 = vrot.slane %v1207, %v1215
    %v1219 = vmul.f32 %v1206, %v1212
    %v1220 = vmul.f32 %v1205, %v1216
    %v1221 = vld [vmem:[%s117] sm:$0x3]
    %v1223 = vlaneseq
    %v1224 = vshrl.u32 %v1223, 7
    %v1225 = vsub.s32 0, %v1224
    %v1226 = vrot.slane %v1221, %v1225
    %v1227 = vlaneseq
    %v1228 = vshrl.u32 %v1227, 7
    %v1229 = vsub.s32 1, %v1228
    %v1230 = vrot.slane %v1221, %v1229
    %v1231 = vcombine.low %v1226, %v1230
    %v1233 = vmul.f32 %v1137, %v1231
    %1234 = vrot.lane.b32.xlu0 %v1137, 127
    %v1235 = vpop.permute.xlu0 %1234
    %1236 = vrot.lane.b32.xlu0 %v1139, 127
    %v1237 = vpop.permute.xlu0 %1236
    %v1238 = vsel %vm135, %v1235, %v1237
    %v1239 = vsel %vm135, %v1237, %v1235
    %v1240 = vld [vmem:[%s138] sm:$0x3]
    %v1242 = vlaneseq
    %v1243 = vshrl.u32 %v1242, 7
    %v1244 = vsub.s32 0, %v1243
    %v1245 = vrot.slane %v1240, %v1244
    %v1246 = vlaneseq
    %v1247 = vshrl.u32 %v1246, 7
    %v1248 = vsub.s32 1, %v1247
    %v1249 = vrot.slane %v1240, %v1248
    %v1252 = vmul.f32 %v1238, %v1245
    %v1253 = vmul.f32 %v1239, %v1249
    %1254 = vrot.lane.b32.xlu0 %v1137, 113
    %v1255 = vpop.permute.xlu0 %1254
    %1256 = vrot.lane.b32.xlu0 %v1139, 113
    %v1257 = vpop.permute.xlu0 %1256
    %v1258 = vsel %vm157, %v1255, %v1257
    %v1259 = vsel %vm157, %v1257, %v1255
    %v1260 = vld [vmem:[%s160] sm:$0x3]
    %v1262 = vlaneseq
    %v1263 = vshrl.u32 %v1262, 7
    %v1264 = vsub.s32 0, %v1263
    %v1265 = vrot.slane %v1260, %v1264
    %v1266 = vlaneseq
    %v1267 = vshrl.u32 %v1266, 7
    %v1268 = vsub.s32 1, %v1267
    %v1269 = vrot.slane %v1260, %v1268
    %v1272 = vmul.f32 %v1258, %v1265
    %v1273 = vmul.f32 %v1259, %v1269
    %1274 = vrot.lane.b32.xlu0 %v1137, 112
    %v1275 = vpop.permute.xlu0 %1274
    %1276 = vrot.lane.b32.xlu0 %v1139, 112
    %v1277 = vpop.permute.xlu0 %1276
    %v1278 = vsel %vm179, %v1275, %v1277
    %v1279 = vsel %vm179, %v1277, %v1275
    %v1280 = vld [vmem:[%s182] sm:$0x3]
    %v1282 = vlaneseq
    %v1283 = vshrl.u32 %v1282, 7
    %v1284 = vsub.s32 0, %v1283
    %v1285 = vrot.slane %v1280, %v1284
    %v1286 = vlaneseq
    %v1287 = vshrl.u32 %v1286, 7
    %v1288 = vsub.s32 1, %v1287
    %v1289 = vrot.slane %v1280, %v1288
    %v1292 = vmul.f32 %v1278, %v1285
    %v1293 = vmul.f32 %v1279, %v1289
    %1294 = vrot.lane.b32.xlu0 %v1137, 111
    %v1295 = vpop.permute.xlu0 %1294
    %1296 = vrot.lane.b32.xlu0 %v1139, 111
    %v1297 = vpop.permute.xlu0 %1296
    %v1298 = vsel %vm201, %v1295, %v1297
    %v1299 = vsel %vm201, %v1297, %v1295
    %v1300 = vld [vmem:[%s204] sm:$0x3]
    %v1302 = vlaneseq
    %v1303 = vshrl.u32 %v1302, 7
    %v1304 = vsub.s32 0, %v1303
    %v1305 = vrot.slane %v1300, %v1304
    %v1306 = vlaneseq
    %v1307 = vshrl.u32 %v1306, 7
    %v1308 = vsub.s32 1, %v1307
    %v1309 = vrot.slane %v1300, %v1308
    %v1312 = vmul.f32 %v1298, %v1305
    %v1313 = vmul.f32 %v1299, %v1309
    %v1314 = vld [vmem:[%s2] sm:$0xff]
    %v1315 = vld [vmem:[%s220] sm:$0xff]
    %v1317 = vsel %vm222, %v1315, 0
    %v1320 = vsel %vm226, %v1179, 0
    %v1323 = vsel %vm226, %v1180, 0
    %1325 = vmatprep.subr.mxu0 %v1323
    %1326 = vmatpush1.msra.mxu0 %v1320
    %1327 = vmatprep.subr.mxu0 0.0
    %1328 = vmatpush1.msra.mxu0 0.0
    %1329 = vmatprep.subr.mxu0 0.0
    %1330 = vmatpush1.msra.mxu0 0.0
    %1331 = vmatprep.subr.mxu0 0.0
    %1332 = vmatpush1.msra.mxu0 0.0
    %1333 = vmatprep.subr.mxu0 0.0
    %1334 = vmatpush1.msra.mxu0 0.0
    %1335 = vmatprep.subr.mxu0 0.0
    %1336 = vmatpush1.msra.mxu0 0.0
    %1337 = vmatprep.subr.mxu0 0.0
    %1338 = vmatpush1.msra.mxu0 0.0
    %1339 = vmatprep.subr.mxu0 0.0
    %1340 = vmatpush1.msra.mxu0 0.0
    %1341 = vmatprep.subr.mxu0 0.0
    %1342 = vmatpush1.msra.mxu0 0.0
    %1343 = vmatprep.subr.mxu0 0.0
    %1344 = vmatpush1.msra.mxu0 0.0
    %1345 = vmatprep.subr.mxu0 0.0
    %1346 = vmatpush1.msra.mxu0 0.0
    %1347 = vmatprep.subr.mxu0 0.0
    %1348 = vmatpush1.msra.mxu0 0.0
    %1349 = vmatprep.subr.mxu0 0.0
    %1350 = vmatpush1.msra.mxu0 0.0
    %1351 = vmatprep.subr.mxu0 0.0
    %1352 = vmatpush1.msra.mxu0 0.0
    %1353 = vmatprep.subr.mxu0 0.0
    %1354 = vmatpush1.msra.mxu0 0.0
    %1355 = vmatprep.subr.mxu0 0.0
    %1356 = vmatpush1.msra.mxu0 0.0
    %1357 = vmatprep.subr.mxu0 0.0
    %1358 = vmatpush1.msra.mxu0 0.0
    %1359 = vmatprep.subr.mxu0 0.0
    %1360 = vmatpush1.msra.mxu0 0.0
    %1361 = vmatprep.subr.mxu0 0.0
    %1362 = vmatpush1.msra.mxu0 0.0
    %1363 = vmatprep.subr.mxu0 0.0
    %1364 = vmatpush1.msra.mxu0 0.0
    %1365 = vmatprep.subr.mxu0 0.0
    %1366 = vmatpush1.msra.mxu0 0.0
    %1367 = vmatprep.subr.mxu0 0.0
    %1368 = vmatpush1.msra.mxu0 0.0
    %1369 = vmatprep.subr.mxu0 0.0
    %1370 = vmatpush1.msra.mxu0 0.0
    %1371 = vmatprep.subr.mxu0 0.0
    %1372 = vmatpush1.msra.mxu0 0.0
    %1373 = vmatprep.subr.mxu0 0.0
    %1374 = vmatpush1.msra.mxu0 0.0
    %1375 = vmatprep.subr.mxu0 0.0
    %1376 = vmatpush1.msra.mxu0 0.0
    %1377 = vmatprep.subr.mxu0 0.0
    %1378 = vmatpush1.msra.mxu0 0.0
    %1379 = vmatprep.subr.mxu0 0.0
    %1380 = vmatpush1.msra.mxu0 0.0
    %1381 = vmatprep.subr.mxu0 0.0
    %1382 = vmatpush1.msra.mxu0 0.0
    %1383 = vmatprep.subr.mxu0 0.0
    %1384 = vmatpush1.msra.mxu0 0.0
    %1385 = vmatprep.subr.mxu0 0.0
    %1386 = vmatpush1.msra.mxu0 0.0
    %1387 = vmatprep.subr.mxu0 0.0
    %1388 = vmatpush1.msra.mxu0 0.0
    %1389 = vmatprep.mubr.f32.mxu0 0.0
    %1390 = vmatmul.mubr.f32.gmra.mrb[0].mxu0 %v1317
    %v1391 = vpop.f32.mrb[0].mxu0
    %v1392 = vadd.f32 0.0, %v1391
    %v1393 = vpop.f32.mrb[0].mxu0
    %v1394 = vadd.f32 0.0, %v1393
    %1395 = vdwg.mxu0
    %v1397 = vsel %vm222, %v1314, 0
    %v1400 = vsel %vm226, %v1159, 0
    %v1403 = vsel %vm226, %v1160, 0
    %1405 = vmatprep.subr.mxu0 %v1403
    %1406 = vmatpush1.msra.mxu0 %v1400
    %1407 = vmatprep.subr.mxu0 0.0
    %1408 = vmatpush1.msra.mxu0 0.0
    %1409 = vmatprep.subr.mxu0 0.0
    %1410 = vmatpush1.msra.mxu0 0.0
    %1411 = vmatprep.subr.mxu0 0.0
    %1412 = vmatpush1.msra.mxu0 0.0
    %1413 = vmatprep.subr.mxu0 0.0
    %1414 = vmatpush1.msra.mxu0 0.0
    %1415 = vmatprep.subr.mxu0 0.0
    %1416 = vmatpush1.msra.mxu0 0.0
    %1417 = vmatprep.subr.mxu0 0.0
    %1418 = vmatpush1.msra.mxu0 0.0
    %1419 = vmatprep.subr.mxu0 0.0
    %1420 = vmatpush1.msra.mxu0 0.0
    %1421 = vmatprep.subr.mxu0 0.0
    %1422 = vmatpush1.msra.mxu0 0.0
    %1423 = vmatprep.subr.mxu0 0.0
    %1424 = vmatpush1.msra.mxu0 0.0
    %1425 = vmatprep.subr.mxu0 0.0
    %1426 = vmatpush1.msra.mxu0 0.0
    %1427 = vmatprep.subr.mxu0 0.0
    %1428 = vmatpush1.msra.mxu0 0.0
    %1429 = vmatprep.subr.mxu0 0.0
    %1430 = vmatpush1.msra.mxu0 0.0
    %1431 = vmatprep.subr.mxu0 0.0
    %1432 = vmatpush1.msra.mxu0 0.0
    %1433 = vmatprep.subr.mxu0 0.0
    %1434 = vmatpush1.msra.mxu0 0.0
    %1435 = vmatprep.subr.mxu0 0.0
    %1436 = vmatpush1.msra.mxu0 0.0
    %1437 = vmatprep.subr.mxu0 0.0
    %1438 = vmatpush1.msra.mxu0 0.0
    %1439 = vmatprep.subr.mxu0 0.0
    %1440 = vmatpush1.msra.mxu0 0.0
    %1441 = vmatprep.subr.mxu0 0.0
    %1442 = vmatpush1.msra.mxu0 0.0
    %1443 = vmatprep.subr.mxu0 0.0
    %1444 = vmatpush1.msra.mxu0 0.0
    %1445 = vmatprep.subr.mxu0 0.0
    %1446 = vmatpush1.msra.mxu0 0.0
    %1447 = vmatprep.subr.mxu0 0.0
    %1448 = vmatpush1.msra.mxu0 0.0
    %1449 = vmatprep.subr.mxu0 0.0
    %1450 = vmatpush1.msra.mxu0 0.0
    %1451 = vmatprep.subr.mxu0 0.0
    %1452 = vmatpush1.msra.mxu0 0.0
    %1453 = vmatprep.subr.mxu0 0.0
    %1454 = vmatpush1.msra.mxu0 0.0
    %1455 = vmatprep.subr.mxu0 0.0
    %1456 = vmatpush1.msra.mxu0 0.0
    %1457 = vmatprep.subr.mxu0 0.0
    %1458 = vmatpush1.msra.mxu0 0.0
    %1459 = vmatprep.subr.mxu0 0.0
    %1460 = vmatpush1.msra.mxu0 0.0
    %1461 = vmatprep.subr.mxu0 0.0
    %1462 = vmatpush1.msra.mxu0 0.0
    %1463 = vmatprep.subr.mxu0 0.0
    %1464 = vmatpush1.msra.mxu0 0.0
    %1465 = vmatprep.subr.mxu0 0.0
    %1466 = vmatpush1.msra.mxu0 0.0
    %1467 = vmatprep.subr.mxu0 0.0
    %1468 = vmatpush1.msra.mxu0 0.0
    %1469 = vmatprep.mubr.f32.mxu0 0.0
    %1470 = vmatmul.mubr.f32.gmra.mrb[0].mxu0 %v1397
    %v1471 = vpop.f32.mrb[0].mxu0
    %v1472 = vadd.f32 %v1392, %v1471
    %v1473 = vpop.f32.mrb[0].mxu0
    %v1474 = vadd.f32 %v1394, %v1473
    %1475 = vdwg.mxu0
    %v1476 = vld [vmem:[%s384] sm:$0xff]
    %v1478 = vsel %vm222, %v1476, 0
    %v1481 = vsel %vm226, %v1199, 0
    %v1484 = vsel %vm226, %v1200, 0
    %1486 = vmatprep.subr.mxu0 %v1484
    %1487 = vmatpush1.msra.mxu0 %v1481
    %1488 = vmatprep.subr.mxu0 0.0
    %1489 = vmatpush1.msra.mxu0 0.0
    %1490 = vmatprep.subr.mxu0 0.0
    %1491 = vmatpush1.msra.mxu0 0.0
    %1492 = vmatprep.subr.mxu0 0.0
    %1493 = vmatpush1.msra.mxu0 0.0
    %1494 = vmatprep.subr.mxu0 0.0
    %1495 = vmatpush1.msra.mxu0 0.0
    %1496 = vmatprep.subr.mxu0 0.0
    %1497 = vmatpush1.msra.mxu0 0.0
    %1498 = vmatprep.subr.mxu0 0.0
    %1499 = vmatpush1.msra.mxu0 0.0
    %1500 = vmatprep.subr.mxu0 0.0
    %1501 = vmatpush1.msra.mxu0 0.0
    %1502 = vmatprep.subr.mxu0 0.0
    %1503 = vmatpush1.msra.mxu0 0.0
    %1504 = vmatprep.subr.mxu0 0.0
    %1505 = vmatpush1.msra.mxu0 0.0
    %1506 = vmatprep.subr.mxu0 0.0
    %1507 = vmatpush1.msra.mxu0 0.0
    %1508 = vmatprep.subr.mxu0 0.0
    %1509 = vmatpush1.msra.mxu0 0.0
    %1510 = vmatprep.subr.mxu0 0.0
    %1511 = vmatpush1.msra.mxu0 0.0
    %1512 = vmatprep.subr.mxu0 0.0
    %1513 = vmatpush1.msra.mxu0 0.0
    %1514 = vmatprep.subr.mxu0 0.0
    %1515 = vmatpush1.msra.mxu0 0.0
    %1516 = vmatprep.subr.mxu0 0.0
    %1517 = vmatpush1.msra.mxu0 0.0
    %1518 = vmatprep.subr.mxu0 0.0
    %1519 = vmatpush1.msra.mxu0 0.0
    %1520 = vmatprep.subr.mxu0 0.0
    %1521 = vmatpush1.msra.mxu0 0.0
    %1522 = vmatprep.subr.mxu0 0.0
    %1523 = vmatpush1.msra.mxu0 0.0
    %1524 = vmatprep.subr.mxu0 0.0
    %1525 = vmatpush1.msra.mxu0 0.0
    %1526 = vmatprep.subr.mxu0 0.0
    %1527 = vmatpush1.msra.mxu0 0.0
    %1528 = vmatprep.subr.mxu0 0.0
    %1529 = vmatpush1.msra.mxu0 0.0
    %1530 = vmatprep.subr.mxu0 0.0
    %1531 = vmatpush1.msra.mxu0 0.0
    %1532 = vmatprep.subr.mxu0 0.0
    %1533 = vmatpush1.msra.mxu0 0.0
    %1534 = vmatprep.subr.mxu0 0.0
    %1535 = vmatpush1.msra.mxu0 0.0
    %1536 = vmatprep.subr.mxu0 0.0
    %1537 = vmatpush1.msra.mxu0 0.0
    %1538 = vmatprep.subr.mxu0 0.0
    %1539 = vmatpush1.msra.mxu0 0.0
    %1540 = vmatprep.subr.mxu0 0.0
    %1541 = vmatpush1.msra.mxu0 0.0
    %1542 = vmatprep.subr.mxu0 0.0
    %1543 = vmatpush1.msra.mxu0 0.0
    %1544 = vmatprep.subr.mxu0 0.0
    %1545 = vmatpush1.msra.mxu0 0.0
    %1546 = vmatprep.subr.mxu0 0.0
    %1547 = vmatpush1.msra.mxu0 0.0
    %1548 = vmatprep.subr.mxu0 0.0
    %1549 = vmatpush1.msra.mxu0 0.0
    %1550 = vmatprep.mubr.f32.mxu0 0.0
    %1551 = vmatmul.mubr.f32.gmra.mrb[0].mxu0 %v1478
    %v1552 = vpop.f32.mrb[0].mxu0
    %v1553 = vadd.f32 0.0, %v1552
    %v1554 = vpop.f32.mrb[0].mxu0
    %v1555 = vadd.f32 0.0, %v1554
    %1556 = vdwg.mxu0
    %v1557 = vadd.f32 %v1472, %v1553
    %v1558 = vadd.f32 %v1474, %v1555
    %v1559 = vld [vmem:[%s468] sm:$0xff]
    %v1561 = vsel %vm222, %v1559, 0
    %v1564 = vsel %vm226, %v1219, 0
    %v1567 = vsel %vm226, %v1220, 0
    %1569 = vmatprep.subr.mxu0 %v1567
    %1570 = vmatpush1.msra.mxu0 %v1564
    %1571 = vmatprep.subr.mxu0 0.0
    %1572 = vmatpush1.msra.mxu0 0.0
    %1573 = vmatprep.subr.mxu0 0.0
    %1574 = vmatpush1.msra.mxu0 0.0
    %1575 = vmatprep.subr.mxu0 0.0
    %1576 = vmatpush1.msra.mxu0 0.0
    %1577 = vmatprep.subr.mxu0 0.0
    %1578 = vmatpush1.msra.mxu0 0.0
    %1579 = vmatprep.subr.mxu0 0.0
    %1580 = vmatpush1.msra.mxu0 0.0
    %1581 = vmatprep.subr.mxu0 0.0
    %1582 = vmatpush1.msra.mxu0 0.0
    %1583 = vmatprep.subr.mxu0 0.0
    %1584 = vmatpush1.msra.mxu0 0.0
    %1585 = vmatprep.subr.mxu0 0.0
    %1586 = vmatpush1.msra.mxu0 0.0
    %1587 = vmatprep.subr.mxu0 0.0
    %1588 = vmatpush1.msra.mxu0 0.0
    %1589 = vmatprep.subr.mxu0 0.0
    %1590 = vmatpush1.msra.mxu0 0.0
    %1591 = vmatprep.subr.mxu0 0.0
    %1592 = vmatpush1.msra.mxu0 0.0
    %1593 = vmatprep.subr.mxu0 0.0
    %1594 = vmatpush1.msra.mxu0 0.0
    %1595 = vmatprep.subr.mxu0 0.0
    %1596 = vmatpush1.msra.mxu0 0.0
    %1597 = vmatprep.subr.mxu0 0.0
    %1598 = vmatpush1.msra.mxu0 0.0
    %1599 = vmatprep.subr.mxu0 0.0
    %1600 = vmatpush1.msra.mxu0 0.0
    %1601 = vmatprep.subr.mxu0 0.0
    %1602 = vmatpush1.msra.mxu0 0.0
    %1603 = vmatprep.subr.mxu0 0.0
    %1604 = vmatpush1.msra.mxu0 0.0
    %1605 = vmatprep.subr.mxu0 0.0
    %1606 = vmatpush1.msra.mxu0 0.0
    %1607 = vmatprep.subr.mxu0 0.0
    %1608 = vmatpush1.msra.mxu0 0.0
    %1609 = vmatprep.subr.mxu0 0.0
    %1610 = vmatpush1.msra.mxu0 0.0
    %1611 = vmatprep.subr.mxu0 0.0
    %1612 = vmatpush1.msra.mxu0 0.0
    %1613 = vmatprep.subr.mxu0 0.0
    %1614 = vmatpush1.msra.mxu0 0.0
    %1615 = vmatprep.subr.mxu0 0.0
    %1616 = vmatpush1.msra.mxu0 0.0
    %1617 = vmatprep.subr.mxu0 0.0
    %1618 = vmatpush1.msra.mxu0 0.0
    %1619 = vmatprep.subr.mxu0 0.0
    %1620 = vmatpush1.msra.mxu0 0.0
    %1621 = vmatprep.subr.mxu0 0.0
    %1622 = vmatpush1.msra.mxu0 0.0
    %1623 = vmatprep.subr.mxu0 0.0
    %1624 = vmatpush1.msra.mxu0 0.0
    %1625 = vmatprep.subr.mxu0 0.0
    %1626 = vmatpush1.msra.mxu0 0.0
    %1627 = vmatprep.subr.mxu0 0.0
    %1628 = vmatpush1.msra.mxu0 0.0
    %1629 = vmatprep.subr.mxu0 0.0
    %1630 = vmatpush1.msra.mxu0 0.0
    %1631 = vmatprep.subr.mxu0 0.0
    %1632 = vmatpush1.msra.mxu0 0.0
    %1633 = vmatprep.mubr.f32.mxu0 0.0
    %1634 = vmatmul.mubr.f32.gmra.mrb[0].mxu0 %v1561
    %v1635 = vpop.f32.mrb[0].mxu0
    %v1636 = vadd.f32 0.0, %v1635
    %v1637 = vpop.f32.mrb[0].mxu0
    %v1638 = vadd.f32 0.0, %v1637
    %1639 = vdwg.mxu0
    %v1640 = vadd.f32 %v1557, %v1636
    %v1641 = vadd.f32 %v1558, %v1638
    %v1642 = vld [vmem:[%s552] sm:$0xff]
    %v1644 = vcombine.high %v1233, %v1233
    %v1646 = vsel %vm222, %v1642, 0
    %v1648 = vsel %vm226, %v1233, 0
    %v1650 = vsel %vm226, %v1644, 0
    %1652 = vmatprep.subr.mxu0 %v1650
    %1653 = vmatpush1.msra.mxu0 %v1648
    %1654 = vmatprep.subr.mxu0 0.0
    %1655 = vmatpush1.msra.mxu0 0.0
    %1656 = vmatprep.subr.mxu0 0.0
    %1657 = vmatpush1.msra.mxu0 0.0
    %1658 = vmatprep.subr.mxu0 0.0
    %1659 = vmatpush1.msra.mxu0 0.0
    %1660 = vmatprep.subr.mxu0 0.0
    %1661 = vmatpush1.msra.mxu0 0.0
    %1662 = vmatprep.subr.mxu0 0.0
    %1663 = vmatpush1.msra.mxu0 0.0
    %1664 = vmatprep.subr.mxu0 0.0
    %1665 = vmatpush1.msra.mxu0 0.0
    %1666 = vmatprep.subr.mxu0 0.0
    %1667 = vmatpush1.msra.mxu0 0.0
    %1668 = vmatprep.subr.mxu0 0.0
    %1669 = vmatpush1.msra.mxu0 0.0
    %1670 = vmatprep.subr.mxu0 0.0
    %1671 = vmatpush1.msra.mxu0 0.0
    %1672 = vmatprep.subr.mxu0 0.0
    %1673 = vmatpush1.msra.mxu0 0.0
    %1674 = vmatprep.subr.mxu0 0.0
    %1675 = vmatpush1.msra.mxu0 0.0
    %1676 = vmatprep.subr.mxu0 0.0
    %1677 = vmatpush1.msra.mxu0 0.0
    %1678 = vmatprep.subr.mxu0 0.0
    %1679 = vmatpush1.msra.mxu0 0.0
    %1680 = vmatprep.subr.mxu0 0.0
    %1681 = vmatpush1.msra.mxu0 0.0
    %1682 = vmatprep.subr.mxu0 0.0
    %1683 = vmatpush1.msra.mxu0 0.0
    %1684 = vmatprep.subr.mxu0 0.0
    %1685 = vmatpush1.msra.mxu0 0.0
    %1686 = vmatprep.subr.mxu0 0.0
    %1687 = vmatpush1.msra.mxu0 0.0
    %1688 = vmatprep.subr.mxu0 0.0
    %1689 = vmatpush1.msra.mxu0 0.0
    %1690 = vmatprep.subr.mxu0 0.0
    %1691 = vmatpush1.msra.mxu0 0.0
    %1692 = vmatprep.subr.mxu0 0.0
    %1693 = vmatpush1.msra.mxu0 0.0
    %1694 = vmatprep.subr.mxu0 0.0
    %1695 = vmatpush1.msra.mxu0 0.0
    %1696 = vmatprep.subr.mxu0 0.0
    %1697 = vmatpush1.msra.mxu0 0.0
    %1698 = vmatprep.subr.mxu0 0.0
    %1699 = vmatpush1.msra.mxu0 0.0
    %1700 = vmatprep.subr.mxu0 0.0
    %1701 = vmatpush1.msra.mxu0 0.0
    %1702 = vmatprep.subr.mxu0 0.0
    %1703 = vmatpush1.msra.mxu0 0.0
    %1704 = vmatprep.subr.mxu0 0.0
    %1705 = vmatpush1.msra.mxu0 0.0
    %1706 = vmatprep.subr.mxu0 0.0
    %1707 = vmatpush1.msra.mxu0 0.0
    %1708 = vmatprep.subr.mxu0 0.0
    %1709 = vmatpush1.msra.mxu0 0.0
    %1710 = vmatprep.subr.mxu0 0.0
    %1711 = vmatpush1.msra.mxu0 0.0
    %1712 = vmatprep.subr.mxu0 0.0
    %1713 = vmatpush1.msra.mxu0 0.0
    %1714 = vmatprep.subr.mxu0 0.0
    %1715 = vmatpush1.msra.mxu0 0.0
    %1716 = vmatprep.mubr.f32.mxu0 0.0
    %1717 = vmatmul.mubr.f32.gmra.mrb[0].mxu0 %v1646
    %v1718 = vpop.f32.mrb[0].mxu0
    %v1719 = vadd.f32 0.0, %v1718
    %v1720 = vpop.f32.mrb[0].mxu0
    %v1721 = vadd.f32 0.0, %v1720
    %1722 = vdwg.mxu0
    %v1723 = vadd.f32 %v1640, %v1719
    %v1724 = vadd.f32 %v1641, %v1721
    %v1725 = vld [vmem:[%s636] sm:$0xff]
    %v1727 = vsel %vm222, %v1725, 0
    %v1730 = vsel %vm226, %v1252, 0
    %v1733 = vsel %vm226, %v1253, 0
    %1735 = vmatprep.subr.mxu0 %v1733
    %1736 = vmatpush1.msra.mxu0 %v1730
    %1737 = vmatprep.subr.mxu0 0.0
    %1738 = vmatpush1.msra.mxu0 0.0
    %1739 = vmatprep.subr.mxu0 0.0
    %1740 = vmatpush1.msra.mxu0 0.0
    %1741 = vmatprep.subr.mxu0 0.0
    %1742 = vmatpush1.msra.mxu0 0.0
    %1743 = vmatprep.subr.mxu0 0.0
    %1744 = vmatpush1.msra.mxu0 0.0
    %1745 = vmatprep.subr.mxu0 0.0
    %1746 = vmatpush1.msra.mxu0 0.0
    %1747 = vmatprep.subr.mxu0 0.0
    %1748 = vmatpush1.msra.mxu0 0.0
    %1749 = vmatprep.subr.mxu0 0.0
    %1750 = vmatpush1.msra.mxu0 0.0
    %1751 = vmatprep.subr.mxu0 0.0
    %1752 = vmatpush1.msra.mxu0 0.0
    %1753 = vmatprep.subr.mxu0 0.0
    %1754 = vmatpush1.msra.mxu0 0.0
    %1755 = vmatprep.subr.mxu0 0.0
    %1756 = vmatpush1.msra.mxu0 0.0
    %1757 = vmatprep.subr.mxu0 0.0
    %1758 = vmatpush1.msra.mxu0 0.0
    %1759 = vmatprep.subr.mxu0 0.0
    %1760 = vmatpush1.msra.mxu0 0.0
    %1761 = vmatprep.subr.mxu0 0.0
    %1762 = vmatpush1.msra.mxu0 0.0
    %1763 = vmatprep.subr.mxu0 0.0
    %1764 = vmatpush1.msra.mxu0 0.0
    %1765 = vmatprep.subr.mxu0 0.0
    %1766 = vmatpush1.msra.mxu0 0.0
    %1767 = vmatprep.subr.mxu0 0.0
    %1768 = vmatpush1.msra.mxu0 0.0
    %1769 = vmatprep.subr.mxu0 0.0
    %1770 = vmatpush1.msra.mxu0 0.0
    %1771 = vmatprep.subr.mxu0 0.0
    %1772 = vmatpush1.msra.mxu0 0.0
    %1773 = vmatprep.subr.mxu0 0.0
    %1774 = vmatpush1.msra.mxu0 0.0
    %1775 = vmatprep.subr.mxu0 0.0
    %1776 = vmatpush1.msra.mxu0 0.0
    %1777 = vmatprep.subr.mxu0 0.0
    %1778 = vmatpush1.msra.mxu0 0.0
    %1779 = vmatprep.subr.mxu0 0.0
    %1780 = vmatpush1.msra.mxu0 0.0
    %1781 = vmatprep.subr.mxu0 0.0
    %1782 = vmatpush1.msra.mxu0 0.0
    %1783 = vmatprep.subr.mxu0 0.0
    %1784 = vmatpush1.msra.mxu0 0.0
    %1785 = vmatprep.subr.mxu0 0.0
    %1786 = vmatpush1.msra.mxu0 0.0
    %1787 = vmatprep.subr.mxu0 0.0
    %1788 = vmatpush1.msra.mxu0 0.0
    %1789 = vmatprep.subr.mxu0 0.0
    %1790 = vmatpush1.msra.mxu0 0.0
    %1791 = vmatprep.subr.mxu0 0.0
    %1792 = vmatpush1.msra.mxu0 0.0
    %1793 = vmatprep.subr.mxu0 0.0
    %1794 = vmatpush1.msra.mxu0 0.0
    %1795 = vmatprep.subr.mxu0 0.0
    %1796 = vmatpush1.msra.mxu0 0.0
    %1797 = vmatprep.subr.mxu0 0.0
    %1798 = vmatpush1.msra.mxu0 0.0
    %1799 = vmatprep.mubr.f32.mxu0 0.0
    %1800 = vmatmul.mubr.f32.gmra.mrb[0].mxu0 %v1727
    %v1801 = vpop.f32.mrb[0].mxu0
    %v1802 = vadd.f32 0.0, %v1801
    %v1803 = vpop.f32.mrb[0].mxu0
    %v1804 = vadd.f32 0.0, %v1803
    %1805 = vdwg.mxu0
    %v1806 = vadd.f32 %v1723, %v1802
    %v1807 = vadd.f32 %v1724, %v1804
    %v1808 = vld [vmem:[%s720] sm:$0xff]
    %v1810 = vsel %vm222, %v1808, 0
    %v1813 = vsel %vm226, %v1272, 0
    %v1816 = vsel %vm226, %v1273, 0
    %1818 = vmatprep.subr.mxu0 %v1816
    %1819 = vmatpush1.msra.mxu0 %v1813
    %1820 = vmatprep.subr.mxu0 0.0
    %1821 = vmatpush1.msra.mxu0 0.0
    %1822 = vmatprep.subr.mxu0 0.0
    %1823 = vmatpush1.msra.mxu0 0.0
    %1824 = vmatprep.subr.mxu0 0.0
    %1825 = vmatpush1.msra.mxu0 0.0
    %1826 = vmatprep.subr.mxu0 0.0
    %1827 = vmatpush1.msra.mxu0 0.0
    %1828 = vmatprep.subr.mxu0 0.0
    %1829 = vmatpush1.msra.mxu0 0.0
    %1830 = vmatprep.subr.mxu0 0.0
    %1831 = vmatpush1.msra.mxu0 0.0
    %1832 = vmatprep.subr.mxu0 0.0
    %1833 = vmatpush1.msra.mxu0 0.0
    %1834 = vmatprep.subr.mxu0 0.0
    %1835 = vmatpush1.msra.mxu0 0.0
    %1836 = vmatprep.subr.mxu0 0.0
    %1837 = vmatpush1.msra.mxu0 0.0
    %1838 = vmatprep.subr.mxu0 0.0
    %1839 = vmatpush1.msra.mxu0 0.0
    %1840 = vmatprep.subr.mxu0 0.0
    %1841 = vmatpush1.msra.mxu0 0.0
    %1842 = vmatprep.subr.mxu0 0.0
    %1843 = vmatpush1.msra.mxu0 0.0
    %1844 = vmatprep.subr.mxu0 0.0
    %1845 = vmatpush1.msra.mxu0 0.0
    %1846 = vmatprep.subr.mxu0 0.0
    %1847 = vmatpush1.msra.mxu0 0.0
    %1848 = vmatprep.subr.mxu0 0.0
    %1849 = vmatpush1.msra.mxu0 0.0
    %1850 = vmatprep.subr.mxu0 0.0
    %1851 = vmatpush1.msra.mxu0 0.0
    %1852 = vmatprep.subr.mxu0 0.0
    %1853 = vmatpush1.msra.mxu0 0.0
    %1854 = vmatprep.subr.mxu0 0.0
    %1855 = vmatpush1.msra.mxu0 0.0
    %1856 = vmatprep.subr.mxu0 0.0
    %1857 = vmatpush1.msra.mxu0 0.0
    %1858 = vmatprep.subr.mxu0 0.0
    %1859 = vmatpush1.msra.mxu0 0.0
    %1860 = vmatprep.subr.mxu0 0.0
    %1861 = vmatpush1.msra.mxu0 0.0
    %1862 = vmatprep.subr.mxu0 0.0
    %1863 = vmatpush1.msra.mxu0 0.0
    %1864 = vmatprep.subr.mxu0 0.0
    %1865 = vmatpush1.msra.mxu0 0.0
    %1866 = vmatprep.subr.mxu0 0.0
    %1867 = vmatpush1.msra.mxu0 0.0
    %1868 = vmatprep.subr.mxu0 0.0
    %1869 = vmatpush1.msra.mxu0 0.0
    %1870 = vmatprep.subr.mxu0 0.0
    %1871 = vmatpush1.msra.mxu0 0.0
    %1872 = vmatprep.subr.mxu0 0.0
    %1873 = vmatpush1.msra.mxu0 0.0
    %1874 = vmatprep.subr.mxu0 0.0
    %1875 = vmatpush1.msra.mxu0 0.0
    %1876 = vmatprep.subr.mxu0 0.0
    %1877 = vmatpush1.msra.mxu0 0.0
    %1878 = vmatprep.subr.mxu0 0.0
    %1879 = vmatpush1.msra.mxu0 0.0
    %1880 = vmatprep.subr.mxu0 0.0
    %1881 = vmatpush1.msra.mxu0 0.0
    %1882 = vmatprep.mubr.f32.mxu0 0.0
    %1883 = vmatmul.mubr.f32.gmra.mrb[0].mxu0 %v1810
    %v1884 = vpop.f32.mrb[0].mxu0
    %v1885 = vadd.f32 0.0, %v1884
    %v1886 = vpop.f32.mrb[0].mxu0
    %v1887 = vadd.f32 0.0, %v1886
    %1888 = vdwg.mxu0
    %v1889 = vadd.f32 %v1806, %v1885
    %v1890 = vadd.f32 %v1807, %v1887
    %v1891 = vld [vmem:[%s804] sm:$0xff]
    %v1893 = vsel %vm222, %v1891, 0
    %v1896 = vsel %vm226, %v1292, 0
    %v1899 = vsel %vm226, %v1293, 0
    %1901 = vmatprep.subr.mxu0 %v1899
    %1902 = vmatpush1.msra.mxu0 %v1896
    %1903 = vmatprep.subr.mxu0 0.0
    %1904 = vmatpush1.msra.mxu0 0.0
    %1905 = vmatprep.subr.mxu0 0.0
    %1906 = vmatpush1.msra.mxu0 0.0
    %1907 = vmatprep.subr.mxu0 0.0
    %1908 = vmatpush1.msra.mxu0 0.0
    %1909 = vmatprep.subr.mxu0 0.0
    %1910 = vmatpush1.msra.mxu0 0.0
    %1911 = vmatprep.subr.mxu0 0.0
    %1912 = vmatpush1.msra.mxu0 0.0
    %1913 = vmatprep.subr.mxu0 0.0
    %1914 = vmatpush1.msra.mxu0 0.0
    %1915 = vmatprep.subr.mxu0 0.0
    %1916 = vmatpush1.msra.mxu0 0.0
    %1917 = vmatprep.subr.mxu0 0.0
    %1918 = vmatpush1.msra.mxu0 0.0
    %1919 = vmatprep.subr.mxu0 0.0
    %1920 = vmatpush1.msra.mxu0 0.0
    %1921 = vmatprep.subr.mxu0 0.0
    %1922 = vmatpush1.msra.mxu0 0.0
    %1923 = vmatprep.subr.mxu0 0.0
    %1924 = vmatpush1.msra.mxu0 0.0
    %1925 = vmatprep.subr.mxu0 0.0
    %1926 = vmatpush1.msra.mxu0 0.0
    %1927 = vmatprep.subr.mxu0 0.0
    %1928 = vmatpush1.msra.mxu0 0.0
    %1929 = vmatprep.subr.mxu0 0.0
    %1930 = vmatpush1.msra.mxu0 0.0
    %1931 = vmatprep.subr.mxu0 0.0
    %1932 = vmatpush1.msra.mxu0 0.0
    %1933 = vmatprep.subr.mxu0 0.0
    %1934 = vmatpush1.msra.mxu0 0.0
    %1935 = vmatprep.subr.mxu0 0.0
    %1936 = vmatpush1.msra.mxu0 0.0
    %1937 = vmatprep.subr.mxu0 0.0
    %1938 = vmatpush1.msra.mxu0 0.0
    %1939 = vmatprep.subr.mxu0 0.0
    %1940 = vmatpush1.msra.mxu0 0.0
    %1941 = vmatprep.subr.mxu0 0.0
    %1942 = vmatpush1.msra.mxu0 0.0
    %1943 = vmatprep.subr.mxu0 0.0
    %1944 = vmatpush1.msra.mxu0 0.0
    %1945 = vmatprep.subr.mxu0 0.0
    %1946 = vmatpush1.msra.mxu0 0.0
    %1947 = vmatprep.subr.mxu0 0.0
    %1948 = vmatpush1.msra.mxu0 0.0
    %1949 = vmatprep.subr.mxu0 0.0
    %1950 = vmatpush1.msra.mxu0 0.0
    %1951 = vmatprep.subr.mxu0 0.0
    %1952 = vmatpush1.msra.mxu0 0.0
    %1953 = vmatprep.subr.mxu0 0.0
    %1954 = vmatpush1.msra.mxu0 0.0
    %1955 = vmatprep.subr.mxu0 0.0
    %1956 = vmatpush1.msra.mxu0 0.0
    %1957 = vmatprep.subr.mxu0 0.0
    %1958 = vmatpush1.msra.mxu0 0.0
    %1959 = vmatprep.subr.mxu0 0.0
    %1960 = vmatpush1.msra.mxu0 0.0
    %1961 = vmatprep.subr.mxu0 0.0
    %1962 = vmatpush1.msra.mxu0 0.0
    %1963 = vmatprep.subr.mxu0 0.0
    %1964 = vmatpush1.msra.mxu0 0.0
    %1965 = vmatprep.mubr.f32.mxu0 0.0
    %1966 = vmatmul.mubr.f32.gmra.mrb[0].mxu0 %v1893
    %v1967 = vpop.f32.mrb[0].mxu0
    %v1968 = vadd.f32 0.0, %v1967
    %v1969 = vpop.f32.mrb[0].mxu0
    %v1970 = vadd.f32 0.0, %v1969
    %1971 = vdwg.mxu0
    %v1972 = vadd.f32 %v1889, %v1968
    %v1973 = vadd.f32 %v1890, %v1970
    %v1974 = vld [vmem:[%s888] sm:$0xff]
    %v1976 = vsel %vm222, %v1974, 0
    %v1979 = vsel %vm226, %v1312, 0
    %v1982 = vsel %vm226, %v1313, 0
    %1984 = vmatprep.subr.mxu0 %v1982
    %1985 = vmatpush1.msra.mxu0 %v1979
    %1986 = vmatprep.subr.mxu0 0.0
    %1987 = vmatpush1.msra.mxu0 0.0
    %1988 = vmatprep.subr.mxu0 0.0
    %1989 = vmatpush1.msra.mxu0 0.0
    %1990 = vmatprep.subr.mxu0 0.0
    %1991 = vmatpush1.msra.mxu0 0.0
    %1992 = vmatprep.subr.mxu0 0.0
    %1993 = vmatpush1.msra.mxu0 0.0
    %1994 = vmatprep.subr.mxu0 0.0
    %1995 = vmatpush1.msra.mxu0 0.0
    %1996 = vmatprep.subr.mxu0 0.0
    %1997 = vmatpush1.msra.mxu0 0.0
    %1998 = vmatprep.subr.mxu0 0.0
    %1999 = vmatpush1.msra.mxu0 0.0
    %2000 = vmatprep.subr.mxu0 0.0
    %2001 = vmatpush1.msra.mxu0 0.0
    %2002 = vmatprep.subr.mxu0 0.0
    %2003 = vmatpush1.msra.mxu0 0.0
    %2004 = vmatprep.subr.mxu0 0.0
    %2005 = vmatpush1.msra.mxu0 0.0
    %2006 = vmatprep.subr.mxu0 0.0
    %2007 = vmatpush1.msra.mxu0 0.0
    %2008 = vmatprep.subr.mxu0 0.0
    %2009 = vmatpush1.msra.mxu0 0.0
    %2010 = vmatprep.subr.mxu0 0.0
    %2011 = vmatpush1.msra.mxu0 0.0
    %2012 = vmatprep.subr.mxu0 0.0
    %2013 = vmatpush1.msra.mxu0 0.0
    %2014 = vmatprep.subr.mxu0 0.0
    %2015 = vmatpush1.msra.mxu0 0.0
    %2016 = vmatprep.subr.mxu0 0.0
    %2017 = vmatpush1.msra.mxu0 0.0
    %2018 = vmatprep.subr.mxu0 0.0
    %2019 = vmatpush1.msra.mxu0 0.0
    %2020 = vmatprep.subr.mxu0 0.0
    %2021 = vmatpush1.msra.mxu0 0.0
    %2022 = vmatprep.subr.mxu0 0.0
    %2023 = vmatpush1.msra.mxu0 0.0
    %2024 = vmatprep.subr.mxu0 0.0
    %2025 = vmatpush1.msra.mxu0 0.0
    %2026 = vmatprep.subr.mxu0 0.0
    %2027 = vmatpush1.msra.mxu0 0.0
    %2028 = vmatprep.subr.mxu0 0.0
    %2029 = vmatpush1.msra.mxu0 0.0
    %2030 = vmatprep.subr.mxu0 0.0
    %2031 = vmatpush1.msra.mxu0 0.0
    %2032 = vmatprep.subr.mxu0 0.0
    %2033 = vmatpush1.msra.mxu0 0.0
    %2034 = vmatprep.subr.mxu0 0.0
    %2035 = vmatpush1.msra.mxu0 0.0
    %2036 = vmatprep.subr.mxu0 0.0
    %2037 = vmatpush1.msra.mxu0 0.0
    %2038 = vmatprep.subr.mxu0 0.0
    %2039 = vmatpush1.msra.mxu0 0.0
    %2040 = vmatprep.subr.mxu0 0.0
    %2041 = vmatpush1.msra.mxu0 0.0
    %2042 = vmatprep.subr.mxu0 0.0
    %2043 = vmatpush1.msra.mxu0 0.0
    %2044 = vmatprep.subr.mxu0 0.0
    %2045 = vmatpush1.msra.mxu0 0.0
    %2046 = vmatprep.subr.mxu0 0.0
    %2047 = vmatpush1.msra.mxu0 0.0
    %2048 = vmatprep.mubr.f32.mxu0 0.0
    %2049 = vmatmul.mubr.f32.gmra.mrb[0].mxu0 %v1976
    %v2050 = vpop.f32.mrb[0].mxu0
    %v2051 = vadd.f32 0.0, %v2050
    %v2052 = vpop.f32.mrb[0].mxu0
    %v2053 = vadd.f32 0.0, %v2052
    %2054 = vdwg.mxu0
    %v2055 = vadd.f32 %v1972, %v2051
    %v2056 = vadd.f32 %v1973, %v2053
    %v2057 = vld [vmem:[%s3] sm:$0xff]
    %2059 = vset.pattern.permute.xlu0 0
    %2060 = vperm.xlu0 %2059, %v2057
    %v2061 = vpop.permute.xlu0 %2060
    %v2063 = vadd.f32 %v2055, %v2061
    %v2064 = vadd.f32 %v2056, %v2061
    %v2065 = vmax.f32 %v2063, 0.0
    %v2066 = vmax.f32 %v2064, 0.0
    %2067 = vrot.lane.b32.xlu0 %v2065, 17
    %v2068 = vpop.permute.xlu0 %2067
    %2069 = vrot.lane.b32.xlu0 %v2066, 17
    %v2070 = vpop.permute.xlu0 %2069
    %v2071 = vsel %vm34, %v2068, %v2070
    %v2072 = vsel %vm34, %v2070, %v2068
    %v2073 = vmul.f32 %v2072, %v1152
    %v2074 = vmul.f32 %v2071, %v1156
    %2075 = vrot.lane.b32.xlu0 %v2065, 16
    %v2076 = vpop.permute.xlu0 %2075
    %2077 = vrot.lane.b32.xlu0 %v2066, 16
    %v2078 = vpop.permute.xlu0 %2077
    %v2079 = vsel %vm55, %v2076, %v2078
    %v2080 = vsel %vm55, %v2078, %v2076
    %v2081 = vmul.f32 %v2080, %v1172
    %v2082 = vmul.f32 %v2079, %v1176
    %2083 = vrot.lane.b32.xlu0 %v2065, 15
    %v2084 = vpop.permute.xlu0 %2083
    %2085 = vrot.lane.b32.xlu0 %v2066, 15
    %v2086 = vpop.permute.xlu0 %2085
    %v2087 = vsel %vm77, %v2084, %v2086
    %v2088 = vsel %vm77, %v2086, %v2084
    %v2089 = vmul.f32 %v2088, %v1192
    %v2090 = vmul.f32 %v2087, %v1196
    %2091 = vrot.lane.b32.xlu0 %v2065, 1
    %v2092 = vpop.permute.xlu0 %2091
    %2093 = vrot.lane.b32.xlu0 %v2066, 1
    %v2094 = vpop.permute.xlu0 %2093
    %v2095 = vsel %vm99, %v2092, %v2094
    %v2096 = vsel %vm99, %v2094, %v2092
    %v2097 = vmul.f32 %v2096, %v1212
    %v2098 = vmul.f32 %v2095, %v1216
    %v2101 = vmul.f32 %v2065, %v1226
    %v2102 = vmul.f32 %v2066, %v1230
    %2103 = vrot.lane.b32.xlu0 %v2065, 127
    %v2104 = vpop.permute.xlu0 %2103
    %2105 = vrot.lane.b32.xlu0 %v2066, 127
    %v2106 = vpop.permute.xlu0 %2105
    %v2107 = vsel %vm135, %v2104, %v2106
    %v2108 = vsel %vm135, %v2106, %v2104
    %v2109 = vmul.f32 %v2107, %v1245
    %v2110 = vmul.f32 %v2108, %v1249
    %2111 = vrot.lane.b32.xlu0 %v2065, 113
    %v2112 = vpop.permute.xlu0 %2111
    %2113 = vrot.lane.b32.xlu0 %v2066, 113
    %v2114 = vpop.permute.xlu0 %2113
    %v2115 = vsel %vm157, %v2112, %v2114
    %v2116 = vsel %vm157, %v2114, %v2112
    %v2117 = vmul.f32 %v2115, %v1265
    %v2118 = vmul.f32 %v2116, %v1269
    %2119 = vrot.lane.b32.xlu0 %v2065, 112
    %v2120 = vpop.permute.xlu0 %2119
    %2121 = vrot.lane.b32.xlu0 %v2066, 112
    %v2122 = vpop.permute.xlu0 %2121
    %v2123 = vsel %vm179, %v2120, %v2122
    %v2124 = vsel %vm179, %v2122, %v2120
    %v2125 = vmul.f32 %v2123, %v1285
    %v2126 = vmul.f32 %v2124, %v1289
    %2127 = vrot.lane.b32.xlu0 %v2065, 111
    %v2128 = vpop.permute.xlu0 %2127
    %2129 = vrot.lane.b32.xlu0 %v2066, 111
    %v2130 = vpop.permute.xlu0 %2129
    %v2131 = vsel %vm201, %v2128, %v2130
    %v2132 = vsel %vm201, %v2130, %v2128
    %v2133 = vmul.f32 %v2131, %v1305
    %v2134 = vmul.f32 %v2132, %v1309
    %v2135 = vld [vmem:[%s4] sm:$0xff]
    %v2136 = vld [vmem:[%s5] sm:$0xff]
    %2138 = vset.pattern.permute.xlu0 0
    %2139 = vperm.xlu0 %2138, %v2136
    %v2140 = vpop.permute.xlu0 %2139
    %v2143 = vsel %vm1057, %v2135, 0
    %2145 = vmatprep.subr.mxu0 %v2074
    %2146 = vmatpush1.msra.mxu0 %v2073
    %2147 = vmatprep.subr.mxu0 %v2082
    %2148 = vmatpush1.msra.mxu0 %v2081
    %2149 = vmatprep.subr.mxu0 %v2090
    %2150 = vmatpush1.msra.mxu0 %v2089
    %2151 = vmatprep.subr.mxu0 %v2098
    %2152 = vmatpush1.msra.mxu0 %v2097
    %2153 = vmatprep.subr.mxu0 %v2102
    %2154 = vmatpush1.msra.mxu0 %v2101
    %2155 = vmatprep.subr.mxu0 %v2110
    %2156 = vmatpush1.msra.mxu0 %v2109
    %2157 = vmatprep.subr.mxu0 %v2118
    %2158 = vmatpush1.msra.mxu0 %v2117
    %2159 = vmatprep.subr.mxu0 %v2126
    %2160 = vmatpush1.msra.mxu0 %v2125
    %2161 = vmatprep.subr.mxu0 %v2134
    %2162 = vmatpush1.msra.mxu0 %v2133
    %2163 = vmatprep.subr.mxu0 0.0
    %2164 = vmatpush1.msra.mxu0 0.0
    %2165 = vmatprep.subr.mxu0 0.0
    %2166 = vmatpush1.msra.mxu0 0.0
    %2167 = vmatprep.subr.mxu0 0.0
    %2168 = vmatpush1.msra.mxu0 0.0
    %2169 = vmatprep.subr.mxu0 0.0
    %2170 = vmatpush1.msra.mxu0 0.0
    %2171 = vmatprep.subr.mxu0 0.0
    %2172 = vmatpush1.msra.mxu0 0.0
    %2173 = vmatprep.subr.mxu0 0.0
    %2174 = vmatpush1.msra.mxu0 0.0
    %2175 = vmatprep.subr.mxu0 0.0
    %2176 = vmatpush1.msra.mxu0 0.0
    %2177 = vmatprep.subr.mxu0 0.0
    %2178 = vmatpush1.msra.mxu0 0.0
    %2179 = vmatprep.subr.mxu0 0.0
    %2180 = vmatpush1.msra.mxu0 0.0
    %2181 = vmatprep.subr.mxu0 0.0
    %2182 = vmatpush1.msra.mxu0 0.0
    %2183 = vmatprep.subr.mxu0 0.0
    %2184 = vmatpush1.msra.mxu0 0.0
    %2185 = vmatprep.subr.mxu0 0.0
    %2186 = vmatpush1.msra.mxu0 0.0
    %2187 = vmatprep.subr.mxu0 0.0
    %2188 = vmatpush1.msra.mxu0 0.0
    %2189 = vmatprep.subr.mxu0 0.0
    %2190 = vmatpush1.msra.mxu0 0.0
    %2191 = vmatprep.subr.mxu0 0.0
    %2192 = vmatpush1.msra.mxu0 0.0
    %2193 = vmatprep.subr.mxu0 0.0
    %2194 = vmatpush1.msra.mxu0 0.0
    %2195 = vmatprep.subr.mxu0 0.0
    %2196 = vmatpush1.msra.mxu0 0.0
    %2197 = vmatprep.subr.mxu0 0.0
    %2198 = vmatpush1.msra.mxu0 0.0
    %2199 = vmatprep.subr.mxu0 0.0
    %2200 = vmatpush1.msra.mxu0 0.0
    %2201 = vmatprep.subr.mxu0 0.0
    %2202 = vmatpush1.msra.mxu0 0.0
    %2203 = vmatprep.subr.mxu0 0.0
    %2204 = vmatpush1.msra.mxu0 0.0
    %2205 = vmatprep.subr.mxu0 0.0
    %2206 = vmatpush1.msra.mxu0 0.0
    %2207 = vmatprep.subr.mxu0 0.0
    %2208 = vmatpush1.msra.mxu0 0.0
    %2209 = vmatprep.mubr.f32.mxu0 0.0
    %2210 = vmatmul.mubr.f32.gmra.mrb[0].mxu0 %v2143
    %v2211 = vpop.f32.mrb[0].mxu0
    %v2212 = vadd.f32 %v2140, %v2211
    %v2213 = vpop.f32.mrb[0].mxu0
    %v2214 = vadd.f32 %v2140, %v2213
    %2215 = vdwg.mxu0
    %v2216 = vmax.f32 %v2212, 0.0
    %v2217 = vmax.f32 %v2214, 0.0
    %s2218 = scalar_lea.vmem [#allocation2], 16
    %2219 = vst [vmem:[%s2218] sm:$0xff] %v2216
    %2220 = vst [vmem:[%s2218 + $0x8] sm:$0xff] %v2217
    // Predicated region
    $region26: #{tpu_custom_call.1} parent=1 // pred_check
      _
    $region27: #{tpu_custom_call.1} parent=1 // pred_check_branch
      %2222 = sbr.rel (0) target = $region29
    $region28: #{tpu_custom_call.1} parent=1 // pred_region
      %s2224 = ssub.s32 512, 512
      %2225 = vsyncadd [#allocation3], %s2224
      %s2226 = sshll.u32 [#allocation2], 4
      %s2227 = int_to_ptr.vmem [resolvable:$true] %s2226
      %2232 = dma.vmem_to_hbm [thread:$0]  %s2227, 512, %s6, [#allocation3], 256, 256, 16
    $region29: #{tpu_custom_call.1} parent=1 // pred_fallthru
      _
    // Predicated region
    $region30: #{tpu_custom_call.1} parent=1 // pred_check
      _
    $region31: #{tpu_custom_call.1} parent=1 // pred_check_branch
      %2234 = sbr.rel (0) target = $region33
    $region32: #{tpu_custom_call.1} parent=1 // pred_region
      %2235 = dma.done [#allocation3], 512
    $region33: #{tpu_custom_call.1} parent=1 // pred_fallthru
      _
    %2236 = vsyncpa [#allocation3], 1

</llo_original>
